<compile_context>
chip_gen: v7x
topology: tpu7x:2x2x1
jax: 0.10.0
libtpu: 0.0.40
codegen_flags: <defaults>
</compile_context>

<pallas_src>
import jax
import jax.numpy as jnp
from jax.experimental import pallas as pl
from jax.experimental.pallas import tpu as pltpu

IN_DIM = 28 * 28      # 784
K_PAD = 896           # 7 * 128, lane-aligned contraction dim for the first matmul
HID = 512
OUT_DIM = 10
OUT_PAD = 128         # lane-dense padded logits width


def mlp_kernel(x_ref, w1_ref, b1_ref, w2_ref, b2_ref, w3_ref, b3_ref, o_ref):
    # Three MXU matmuls on bf16 operands with f32 accumulation; bias add + ReLU
    # run in f32 on the VPU, activations cast back to bf16 between layers.
    h1 = jnp.dot(x_ref[...], w1_ref[...], preferred_element_type=jnp.float32) + b1_ref[...]
    h1 = jnp.maximum(h1, 0.0).astype(jnp.bfloat16)
    h2 = jnp.dot(h1, w2_ref[...], preferred_element_type=jnp.float32) + b2_ref[...]
    h2 = jnp.maximum(h2, 0.0).astype(jnp.bfloat16)
    logits = jnp.dot(h2, w3_ref[...], preferred_element_type=jnp.float32) + b3_ref[...]
    o_ref[...] = logits  # (TB, 128) lane-dense, unmasked f32 store


def init_params(key):
    """Synthetic f32 params matching the PyTorch module's layer shapes
    ((in, out) convention; biases as (1, out))."""
    k1, k2, k3, k4, k5, k6 = jax.random.split(key, 6)
    w1 = jax.random.normal(k1, (IN_DIM, HID), jnp.float32) * (1.0 / IN_DIM) ** 0.5
    b1 = jax.random.normal(k2, (1, HID), jnp.float32) * 0.01
    w2 = jax.random.normal(k3, (HID, HID), jnp.float32) * (1.0 / HID) ** 0.5
    b2 = jax.random.normal(k4, (1, HID), jnp.float32) * 0.01
    w3 = jax.random.normal(k5, (HID, OUT_DIM), jnp.float32) * (1.0 / HID) ** 0.5
    b3 = jax.random.normal(k6, (1, OUT_DIM), jnp.float32) * 0.01
    return w1, b1, w2, b2, w3, b3


def prepare_params(params):
    """One-time pad + cast: K 784->896 (zero rows), N 10->128 (zero cols),
    weights -> bf16 (halves HBM weight traffic, dominant cost), biases stay f32."""
    w1, b1, w2, b2, w3, b3 = params
    w1p = jnp.zeros((K_PAD, HID), jnp.float32).at[:IN_DIM, :].set(w1)
    w3p = jnp.zeros((HID, OUT_PAD), jnp.float32).at[:, :OUT_DIM].set(w3)
    b3p = jnp.zeros((1, OUT_PAD), jnp.float32).at[:, :OUT_DIM].set(b3)
    return (w1p.astype(jnp.bfloat16), b1.astype(jnp.float32),
            w2.astype(jnp.bfloat16), b2.astype(jnp.float32),
            w3p.astype(jnp.bfloat16), b3p.astype(jnp.float32))


@jax.jit
def neural_network_forward(x_nchw, prepared_params):
    """x_nchw: (B, 1, 28, 28) float32. Returns logits (B, 10) float32."""
    w1, b1, w2, b2, w3, b3 = prepared_params
    B = x_nchw.shape[0]
    # nn.Flatten(): keep batch dim, flatten the rest row-major; cast to bf16.
    x_flat = x_nchw.reshape(B, -1).astype(jnp.bfloat16)

    # Batch tile: 256 rows fills the 256x256 MXU on v6e/v7x once B is large;
    # for tiny B just round up to an 8-sublane multiple (single grid step).
    TB = 256 if B >= 256 else max(8, ((B + 7) // 8) * 8)
    Bp = ((B + TB - 1) // TB) * TB

    # Zero-pad batch to a multiple of TB and K to 896; padded rows/cols are
    # exact zeros so they do not perturb the real logits.
    x_pad = jnp.zeros((Bp, K_PAD), jnp.bfloat16).at[:B, :IN_DIM].set(x_flat)

    const = lambda i: (0, 0)  # weights/biases: same block every grid step -> stay resident
    out_pad = pl.pallas_call(
        mlp_kernel,
        out_shape=jax.ShapeDtypeStruct((Bp, OUT_PAD), jnp.float32),
        grid_spec=pltpu.PrefetchScalarGridSpec(
            num_scalar_prefetch=0,
            grid=(Bp // TB,),
            in_specs=[
                pl.BlockSpec((TB, K_PAD), lambda i: (i, 0)),   # x: tiled + pipelined over batch
                pl.BlockSpec((K_PAD, HID), const),
                pl.BlockSpec((1, HID), const),
                pl.BlockSpec((HID, HID), const),
                pl.BlockSpec((1, HID), const),
                pl.BlockSpec((HID, OUT_PAD), const),
                pl.BlockSpec((1, OUT_PAD), const),
            ],
            out_specs=pl.BlockSpec((TB, OUT_PAD), lambda i: (i, 0)),
        ),
        compiler_params=pltpu.CompilerParams(
            dimension_semantics=("parallel",),   # megacore sharding on v7x
            vmem_limit_bytes=64 << 20,           # headroom for larger TB; v5e default is only 16 MiB
        ),
    )(x_pad, w1, b1, w2, b2, w3, b3)

    # Slice padded batch rows and lane-padded logit columns back to (B, 10).
    return out_pad[:B, :OUT_DIM]


if __name__ == "__main__":
    key = jax.random.PRNGKey(0)
    k_x, k_p = jax.random.split(key)

    B = 8
    x = jax.random.normal(k_x, (B, 1, 28, 28), jnp.float32)
    params = init_params(k_p)
    prepared = prepare_params(params)

    logits = neural_network_forward(x, prepared)
    jax.block_until_ready(logits)
    assert logits.shape == (B, OUT_DIM)

    # Pure-JAX reference of the same bf16-operand / f32-accumulate forward pass.
    w1, b1, w2, b2, w3, b3 = params
    xf = x.reshape(B, -1).astype(jnp.bfloat16)
    w1b, w2b, w3b = (w.astype(jnp.bfloat16) for w in (w1, w2, w3))
    h = jnp.maximum(jnp.dot(xf, w1b, preferred_element_type=jnp.float32) + b1, 0.0)
    h = jnp.maximum(jnp.dot(h.astype(jnp.bfloat16), w2b, preferred_element_type=jnp.float32) + b2, 0.0)
    ref = jnp.dot(h.astype(jnp.bfloat16), w3b, preferred_element_type=jnp.float32) + b3

    assert jnp.allclose(logits, ref, atol=2e-2, rtol=2e-2), (
        float(jnp.max(jnp.abs(logits - ref))))

    print("KERNEL_OK")
</pallas_src>

<mosaic_0001>
module attributes {stable_mosaic.version = 11 : i64} {
  func.func @mlp_kernel(%arg0: i32, %arg1: memref<8x896xbf16, #tpu.memory_space<vmem>>, %arg2: memref<896x512xbf16, #tpu.memory_space<vmem>>, %arg3: memref<1x512xf32, #tpu.memory_space<vmem>>, %arg4: memref<512x512xbf16, #tpu.memory_space<vmem>>, %arg5: memref<1x512xf32, #tpu.memory_space<vmem>>, %arg6: memref<512x128xbf16, #tpu.memory_space<vmem>>, %arg7: memref<1x128xf32, #tpu.memory_space<vmem>>, %arg8: memref<8x128xf32, #tpu.memory_space<vmem>>) attributes {dimension_semantics = [#tpu.dimension_semantics<parallel>], iteration_bounds = array<i64: 1>, scalar_prefetch = 0 : i64, scratch_operands = 0 : i64, tpu.core_type = #tpu.core_type<tc>, window_params = [{transform_indices = @transform_0, window_bounds = array<i64: 8, 896>}, {pipeline_mode = #tpu.pipeline_mode<synchronous>, transform_indices = @transform_1, window_bounds = array<i64: 896, 512>}, {pipeline_mode = #tpu.pipeline_mode<synchronous>, transform_indices = @transform_2, window_bounds = array<i64: 1, 512>}, {pipeline_mode = #tpu.pipeline_mode<synchronous>, transform_indices = @transform_3, window_bounds = array<i64: 512, 512>}, {pipeline_mode = #tpu.pipeline_mode<synchronous>, transform_indices = @transform_4, window_bounds = array<i64: 1, 512>}, {pipeline_mode = #tpu.pipeline_mode<synchronous>, transform_indices = @transform_5, window_bounds = array<i64: 512, 128>}, {pipeline_mode = #tpu.pipeline_mode<synchronous>, transform_indices = @transform_6, window_bounds = array<i64: 1, 128>}, {transform_indices = @transform_7, window_bounds = array<i64: 8, 128>}]} {
    %c0 = arith.constant 0 : index
    %c0_0 = arith.constant 0 : index
    %0 = vector.load %arg1[%c0, %c0_0] : memref<8x896xbf16, #tpu.memory_space<vmem>>, vector<8x896xbf16>
    %c0_1 = arith.constant 0 : index
    %c0_2 = arith.constant 0 : index
    %1 = vector.load %arg2[%c0_1, %c0_2] : memref<896x512xbf16, #tpu.memory_space<vmem>>, vector<896x512xbf16>
    %cst = arith.constant dense<0.000000e+00> : vector<8x512xf32>
    %2 = tpu.matmul %0, %1, %cst {dimension_numbers = #tpu.dot_dimension_numbers<[1], [0], [0], [1], [0, 0, 1, 1], [], []>} : vector<8x896xbf16>, vector<896x512xbf16>, vector<8x512xf32> -> vector<8x512xf32>
    %c0_3 = arith.constant 0 : index
    %c0_4 = arith.constant 0 : index
    %3 = vector.load %arg3[%c0_3, %c0_4] : memref<1x512xf32, #tpu.memory_space<vmem>>, vector<1x512xf32>
    %4 = vector.broadcast %3 : vector<1x512xf32> to vector<8x512xf32>
    %5 = arith.addf %2, %4 : vector<8x512xf32>
    %cst_5 = arith.constant 0.000000e+00 : f32
    %6 = vector.broadcast %cst_5 : f32 to vector<8x512xf32>
    %7 = arith.maximumf %5, %6 : vector<8x512xf32>
    %8 = arith.truncf %7 : vector<8x512xf32> to vector<8x512xbf16>
    %c0_6 = arith.constant 0 : index
    %c0_7 = arith.constant 0 : index
    %9 = vector.load %arg4[%c0_6, %c0_7] : memref<512x512xbf16, #tpu.memory_space<vmem>>, vector<512x512xbf16>
    %cst_8 = arith.constant dense<0.000000e+00> : vector<8x512xf32>
    %10 = tpu.matmul %8, %9, %cst_8 {dimension_numbers = #tpu.dot_dimension_numbers<[1], [0], [0], [1], [0, 0, 1, 1], [], []>} : vector<8x512xbf16>, vector<512x512xbf16>, vector<8x512xf32> -> vector<8x512xf32>
    %c0_9 = arith.constant 0 : index
    %c0_10 = arith.constant 0 : index
    %11 = vector.load %arg5[%c0_9, %c0_10] : memref<1x512xf32, #tpu.memory_space<vmem>>, vector<1x512xf32>
    %12 = vector.broadcast %11 : vector<1x512xf32> to vector<8x512xf32>
    %13 = arith.addf %10, %12 : vector<8x512xf32>
    %cst_11 = arith.constant 0.000000e+00 : f32
    %14 = vector.broadcast %cst_11 : f32 to vector<8x512xf32>
    %15 = arith.maximumf %13, %14 : vector<8x512xf32>
    %16 = arith.truncf %15 : vector<8x512xf32> to vector<8x512xbf16>
    %c0_12 = arith.constant 0 : index
    %c0_13 = arith.constant 0 : index
    %17 = vector.load %arg6[%c0_12, %c0_13] : memref<512x128xbf16, #tpu.memory_space<vmem>>, vector<512x128xbf16>
    %cst_14 = arith.constant dense<0.000000e+00> : vector<8x128xf32>
    %18 = tpu.matmul %16, %17, %cst_14 {dimension_numbers = #tpu.dot_dimension_numbers<[1], [0], [0], [1], [0, 0, 1, 1], [], []>} : vector<8x512xbf16>, vector<512x128xbf16>, vector<8x128xf32> -> vector<8x128xf32>
    %c0_15 = arith.constant 0 : index
    %c0_16 = arith.constant 0 : index
    %19 = vector.load %arg7[%c0_15, %c0_16] : memref<1x128xf32, #tpu.memory_space<vmem>>, vector<1x128xf32>
    %20 = vector.broadcast %19 : vector<1x128xf32> to vector<8x128xf32>
    %21 = arith.addf %18, %20 : vector<8x128xf32>
    %c0_17 = arith.constant 0 : index
    %c0_18 = arith.constant 0 : index
    %22 = vector.load %arg8[%c0_17, %c0_18] : memref<8x128xf32, #tpu.memory_space<vmem>>, vector<8x128xf32>
    tpu.vector_store %arg8[%c0_17, %c0_18], %21 {strides = array<i32>} : memref<8x128xf32, #tpu.memory_space<vmem>>, vector<8x128xf32>,
    return
  }
  func.func @transform_0(%arg0: i32) -> (i32, i32) {
    %c0_i32 = arith.constant 0 : i32
    %c0_i32_0 = arith.constant 0 : i32
    return %arg0, %c0_i32 : i32, i32
  }
  func.func @transform_1(%arg0: i32) -> (i32, i32) {
    %c0_i32 = arith.constant 0 : i32
    %c0_i32_0 = arith.constant 0 : i32
    %c0_i32_1 = arith.constant 0 : i32
    return %c0_i32, %c0_i32_0 : i32, i32
  }
  func.func @transform_2(%arg0: i32) -> (i32, i32) {
    %c0_i32 = arith.constant 0 : i32
    %c0_i32_0 = arith.constant 0 : i32
    %c0_i32_1 = arith.constant 0 : i32
    return %c0_i32, %c0_i32_0 : i32, i32
  }
  func.func @transform_3(%arg0: i32) -> (i32, i32) {
    %c0_i32 = arith.constant 0 : i32
    %c0_i32_0 = arith.constant 0 : i32
    %c0_i32_1 = arith.constant 0 : i32
    return %c0_i32, %c0_i32_0 : i32, i32
  }
  func.func @transform_4(%arg0: i32) -> (i32, i32) {
    %c0_i32 = arith.constant 0 : i32
    %c0_i32_0 = arith.constant 0 : i32
    %c0_i32_1 = arith.constant 0 : i32
    return %c0_i32, %c0_i32_0 : i32, i32
  }
  func.func @transform_5(%arg0: i32) -> (i32, i32) {
    %c0_i32 = arith.constant 0 : i32
    %c0_i32_0 = arith.constant 0 : i32
    %c0_i32_1 = arith.constant 0 : i32
    return %c0_i32, %c0_i32_0 : i32, i32
  }
  func.func @transform_6(%arg0: i32) -> (i32, i32) {
    %c0_i32 = arith.constant 0 : i32
    %c0_i32_0 = arith.constant 0 : i32
    %c0_i32_1 = arith.constant 0 : i32
    return %c0_i32, %c0_i32_0 : i32, i32
  }
  func.func @transform_7(%arg0: i32) -> (i32, i32) {
    %c0_i32 = arith.constant 0 : i32
    %c0_i32_0 = arith.constant 0 : i32
    return %arg0, %c0_i32 : i32, i32
  }
}

</mosaic_0001>

<llo_original>
// kernel: neural_network_forward.1
$region0: #{neural_network_forward.1}
  #allocation0 [shape = 'u32[]', space=smem, size = 0x4, offset = 0x4, fixed_abs, tag = 'smem constant byte address 0x4 - core index']
  #allocation1 [shape = 'u32[144,128]{1,0:T(1,128)}', space=vmem, size = 0x12000, scoped, tag = 'internal scratch']
  %s0 = inlined_call_operand.hbm [shape: bf16[8,896], index: 0, kind: input, shape index: {}]
  %s1 = inlined_call_operand.hbm [shape: bf16[896,512], index: 1, kind: input, shape index: {}]
  %s2 = inlined_call_operand.hbm [shape: f32[1,512], index: 2, kind: input, shape index: {}]
  %s3 = inlined_call_operand.hbm [shape: bf16[512,512], index: 3, kind: input, shape index: {}]
  %s4 = inlined_call_operand.hbm [shape: f32[1,512], index: 4, kind: input, shape index: {}]
  %s5 = inlined_call_operand.hbm [shape: bf16[512,128], index: 5, kind: input, shape index: {}]
  %s6 = inlined_call_operand.hbm [shape: f32[1,128], index: 6, kind: input, shape index: {}]
  %s7 = inlined_call_operand.hbm [shape: f32[8,128], index: 7, kind: output, shape index: {}]
  %s8 = sld [smem:[#allocation0]]
  $region66: #{neural_network_forward.1} parent=0
    _
  %s10 = ssub.s32 1, %s8
  %s11 = scalar_select 0, %s10, %s8
  $region1: #{neural_network_forward.1} parent=0
    #allocation2 [shape = 'u8[14336]{0}', space=vmem, size = 0x3800, scoped, tag = 'input window, operand 0, single buffered']
    #allocation3 [shape = 's32[1]{0}', space=sflag, size = 0x4, scoped, tag = 'scoped memory for neural_network_forward.1']
    #allocation4 [shape = 's32[1]{0}', space=sflag, size = 0x4, scoped, tag = 'scoped memory for neural_network_forward.1']
    #allocation5 [shape = 'u8[917504]{0}', space=vmem, size = 0xe0000, scoped, tag = 'input window, operand 1, single buffered']
    #allocation6 [shape = 's32[1]{0}', space=sflag, size = 0x4, scoped, tag = 'scoped memory for neural_network_forward.1']
    #allocation7 [shape = 'u8[2048]{0}', space=vmem, size = 0x800, scoped, tag = 'input window, operand 2, single buffered']
    #allocation8 [shape = 'u8[524288]{0}', space=vmem, size = 0x80000, scoped, tag = 'input window, operand 3, single buffered']
    #allocation9 [shape = 's32[1]{0}', space=sflag, size = 0x4, scoped, tag = 'scoped memory for neural_network_forward.1']
    #allocation10 [shape = 'u8[2048]{0}', space=vmem, size = 0x800, scoped, tag = 'input window, operand 4, single buffered']
    #allocation11 [shape = 'u8[131072]{0}', space=vmem, size = 0x20000, scoped, tag = 'input window, operand 5, single buffered']
    #allocation12 [shape = 's32[1]{0}', space=sflag, size = 0x4, scoped, tag = 'scoped memory for neural_network_forward.1']
    #allocation13 [shape = 'u8[512]{0}', space=vmem, size = 0x400, scoped, tag = 'input window, operand 6, single buffered']
    #allocation14 [shape = 'u8[4096]{0}', space=vmem, size = 0x1000, scoped, tag = 'output window, operand 0, single buffered']
    %12 = vsyncpa [#allocation3], 0
    %13 = vsyncpa [#allocation6], 0
    %14 = vsyncpa [#allocation9], 0
    %15 = vsyncpa [#allocation12], 0
    %16 = vsyncpa [#allocation4], 0
    // Predicated region
    $region2: #{neural_network_forward.1} parent=1 // pred_check
      _
    $region3: #{neural_network_forward.1} parent=1 // pred_check_branch
      %18 = sbr.rel (0) target = $region5
    $region4: #{neural_network_forward.1} parent=1 // pred_region
      %s20 = ssub.s32 448, 448
      %21 = vsyncadd [#allocation3], %s20
      %s23 = sshll.u32 [#allocation2], 4
      %s24 = int_to_ptr.vmem [resolvable:$true] %s23
      %26 = dma.hbm_to_vmem [thread:$0]  %s0, 448, %s24, [#allocation3]
    $region5: #{neural_network_forward.1} parent=1 // pred_fallthru
      _
    // Predicated region
    $region6: #{neural_network_forward.1} parent=1 // pred_check
      _
    $region7: #{neural_network_forward.1} parent=1 // pred_check_branch
      %28 = sbr.rel (0) target = $region9
    $region8: #{neural_network_forward.1} parent=1 // pred_region
      %s30 = ssub.s32 28672, 28672
      %31 = vsyncadd [#allocation6], %s30
      %s32 = sshll.u32 [#allocation5], 4
      %s33 = int_to_ptr.vmem [resolvable:$true] %s32
      %38 = dma.hbm_to_vmem [thread:$0]  %s1, 28672, %s33, [#allocation6], 256, 256, 16
    $region9: #{neural_network_forward.1} parent=1 // pred_fallthru
      _
    // Predicated region
    $region10: #{neural_network_forward.1} parent=1 // pred_check
      _
    $region11: #{neural_network_forward.1} parent=1 // pred_check_branch
      %40 = sbr.rel (0) target = $region13
    $region12: #{neural_network_forward.1} parent=1 // pred_region
      %s42 = ssub.s32 64, 64
      %43 = vsyncadd [#allocation6], %s42
      %s45 = sshll.u32 [#allocation7], 4
      %s46 = int_to_ptr.vmem [resolvable:$true] %s45
      %48 = dma.hbm_to_vmem [thread:$0]  %s2, 64, %s46, [#allocation6]
    $region13: #{neural_network_forward.1} parent=1 // pred_fallthru
      _
    // Predicated region
    $region14: #{neural_network_forward.1} parent=1 // pred_check
      _
    $region15: #{neural_network_forward.1} parent=1 // pred_check_branch
      %50 = sbr.rel (0) target = $region17
    $region16: #{neural_network_forward.1} parent=1 // pred_region
      %s52 = ssub.s32 16384, 16384
      %53 = vsyncadd [#allocation9], %s52
      %s54 = sshll.u32 [#allocation8], 4
      %s55 = int_to_ptr.vmem [resolvable:$true] %s54
      %60 = dma.hbm_to_vmem [thread:$0]  %s3, 16384, %s55, [#allocation9], 256, 256, 16
    $region17: #{neural_network_forward.1} parent=1 // pred_fallthru
      _
    // Predicated region
    $region18: #{neural_network_forward.1} parent=1 // pred_check
      _
    $region19: #{neural_network_forward.1} parent=1 // pred_check_branch
      %62 = sbr.rel (0) target = $region21
    $region20: #{neural_network_forward.1} parent=1 // pred_region
      %s64 = ssub.s32 64, 64
      %65 = vsyncadd [#allocation9], %s64
      %s67 = sshll.u32 [#allocation10], 4
      %s68 = int_to_ptr.vmem [resolvable:$true] %s67
      %70 = dma.hbm_to_vmem [thread:$0]  %s4, 64, %s68, [#allocation9]
    $region21: #{neural_network_forward.1} parent=1 // pred_fallthru
      _
    // Predicated region
    $region22: #{neural_network_forward.1} parent=1 // pred_check
      _
    $region23: #{neural_network_forward.1} parent=1 // pred_check_branch
      %72 = sbr.rel (0) target = $region25
    $region24: #{neural_network_forward.1} parent=1 // pred_region
      %s74 = ssub.s32 4096, 4096
      %75 = vsyncadd [#allocation12], %s74
      %s76 = sshll.u32 [#allocation11], 4
      %s77 = int_to_ptr.vmem [resolvable:$true] %s76
      %82 = dma.hbm_to_vmem [thread:$0]  %s5, 4096, %s77, [#allocation12], 64, 64, 4
    $region25: #{neural_network_forward.1} parent=1 // pred_fallthru
      _
    // Predicated region
    $region26: #{neural_network_forward.1} parent=1 // pred_check
      _
    $region27: #{neural_network_forward.1} parent=1 // pred_check_branch
      %84 = sbr.rel (0) target = $region29
    $region28: #{neural_network_forward.1} parent=1 // pred_region
      %s86 = ssub.s32 16, 16
      %87 = vsyncadd [#allocation12], %s86
      %s89 = sshll.u32 [#allocation13], 4
      %s90 = int_to_ptr.vmem [resolvable:$true] %s89
      %92 = dma.hbm_to_vmem [thread:$0]  %s6, 16, %s90, [#allocation12]
    $region29: #{neural_network_forward.1} parent=1 // pred_fallthru
      _
    // Predicated region
    $region30: #{neural_network_forward.1} parent=1 // pred_check
      _
    $region31: #{neural_network_forward.1} parent=1 // pred_check_branch
      %94 = sbr.rel (0) target = $region33
    $region32: #{neural_network_forward.1} parent=1 // pred_region
      %95 = dma.done [#allocation3], 448
    $region33: #{neural_network_forward.1} parent=1 // pred_fallthru
      _
    // Predicated region
    $region34: #{neural_network_forward.1} parent=1 // pred_check
      _
    $region35: #{neural_network_forward.1} parent=1 // pred_check_branch
      %97 = sbr.rel (0) target = $region37
    $region36: #{neural_network_forward.1} parent=1 // pred_region
      %98 = dma.done [#allocation6], 28672
    $region37: #{neural_network_forward.1} parent=1 // pred_fallthru
      _
    // Predicated region
    $region38: #{neural_network_forward.1} parent=1 // pred_check
      _
    $region39: #{neural_network_forward.1} parent=1 // pred_check_branch
      %100 = sbr.rel (0) target = $region41
    $region40: #{neural_network_forward.1} parent=1 // pred_region
      %101 = dma.done [#allocation6], 64
    $region41: #{neural_network_forward.1} parent=1 // pred_fallthru
      _
    // Predicated region
    $region42: #{neural_network_forward.1} parent=1 // pred_check
      _
    $region43: #{neural_network_forward.1} parent=1 // pred_check_branch
      %103 = sbr.rel (0) target = $region45
    $region44: #{neural_network_forward.1} parent=1 // pred_region
      %104 = dma.done [#allocation9], 16384
    $region45: #{neural_network_forward.1} parent=1 // pred_fallthru
      _
    // Predicated region
    $region46: #{neural_network_forward.1} parent=1 // pred_check
      _
    $region47: #{neural_network_forward.1} parent=1 // pred_check_branch
      %106 = sbr.rel (0) target = $region49
    $region48: #{neural_network_forward.1} parent=1 // pred_region
      %107 = dma.done [#allocation9], 64
    $region49: #{neural_network_forward.1} parent=1 // pred_fallthru
      _
    // Predicated region
    $region50: #{neural_network_forward.1} parent=1 // pred_check
      _
    $region51: #{neural_network_forward.1} parent=1 // pred_check_branch
      %109 = sbr.rel (0) target = $region53
    $region52: #{neural_network_forward.1} parent=1 // pred_region
      %110 = dma.done [#allocation12], 4096
    $region53: #{neural_network_forward.1} parent=1 // pred_fallthru
      _
    // Predicated region
    $region54: #{neural_network_forward.1} parent=1 // pred_check
      _
    $region55: #{neural_network_forward.1} parent=1 // pred_check_branch
      %112 = sbr.rel (0) target = $region57
    $region56: #{neural_network_forward.1} parent=1 // pred_region
      %113 = dma.done [#allocation12], 16
    $region57: #{neural_network_forward.1} parent=1 // pred_fallthru
      _
    %v115 = vld [vmem:[#allocation2] sm:$0xff]
    %v116 = vld [vmem:[#allocation2 + $0x8] sm:$0xff]
    %v117 = vld [vmem:[#allocation2 + $0x10] sm:$0xff]
    %v118 = vld [vmem:[#allocation2 + $0x18] sm:$0xf]
    %v119 = vld [vmem:[#allocation5] sm:$0xff]
    %v120 = vld [vmem:[#allocation5 + $0x8] sm:$0xff]
    %v121 = vld [vmem:[#allocation5 + $0x10] sm:$0xff]
    %v122 = vld [vmem:[#allocation5 + $0x18] sm:$0xff]
    %v123 = vld [vmem:[#allocation5 + $0x20] sm:$0xff]
    %v124 = vld [vmem:[#allocation5 + $0x28] sm:$0xff]
    %v125 = vld [vmem:[#allocation5 + $0x30] sm:$0xff]
    %v126 = vld [vmem:[#allocation5 + $0x38] sm:$0xff]
    %v127 = vld [vmem:[#allocation5 + $0x40] sm:$0xff]
    %v128 = vld [vmem:[#allocation5 + $0x48] sm:$0xff]
    %v129 = vld [vmem:[#allocation5 + $0x50] sm:$0xff]
    %v130 = vld [vmem:[#allocation5 + $0x58] sm:$0xff]
    %v131 = vld [vmem:[#allocation5 + $0x60] sm:$0xff]
    %v132 = vld [vmem:[#allocation5 + $0x68] sm:$0xff]
    %v133 = vld [vmem:[#allocation5 + $0x70] sm:$0xff]
    %v134 = vld [vmem:[#allocation5 + $0x78] sm:$0xff]
    %v135 = vld [vmem:[#allocation5 + $0x80] sm:$0xff]
    %v136 = vld [vmem:[#allocation5 + $0x88] sm:$0xff]
    %v137 = vld [vmem:[#allocation5 + $0x90] sm:$0xff]
    %v138 = vld [vmem:[#allocation5 + $0x98] sm:$0xff]
    %v139 = vld [vmem:[#allocation5 + $0xa0] sm:$0xff]
    %v140 = vld [vmem:[#allocation5 + $0xa8] sm:$0xff]
    %v141 = vld [vmem:[#allocation5 + $0xb0] sm:$0xff]
    %v142 = vld [vmem:[#allocation5 + $0xb8] sm:$0xff]
    %v143 = vld [vmem:[#allocation5 + $0xc0] sm:$0xff]
    %v144 = vld [vmem:[#allocation5 + $0xc8] sm:$0xff]
    %v145 = vld [vmem:[#allocation5 + $0xd0] sm:$0xff]
    %v146 = vld [vmem:[#allocation5 + $0xd8] sm:$0xff]
    %v147 = vld [vmem:[#allocation5 + $0xe0] sm:$0xff]
    %v148 = vld [vmem:[#allocation5 + $0xe8] sm:$0xff]
    %v149 = vld [vmem:[#allocation5 + $0xf0] sm:$0xff]
    %v150 = vld [vmem:[#allocation5 + $0xf8] sm:$0xff]
    %v151 = vld [vmem:[#allocation5 + $0x100] sm:$0xff]
    %v152 = vld [vmem:[#allocation5 + $0x108] sm:$0xff]
    %v153 = vld [vmem:[#allocation5 + $0x110] sm:$0xff]
    %v154 = vld [vmem:[#allocation5 + $0x118] sm:$0xff]
    %v155 = vld [vmem:[#allocation5 + $0x120] sm:$0xff]
    %v156 = vld [vmem:[#allocation5 + $0x128] sm:$0xff]
    %v157 = vld [vmem:[#allocation5 + $0x130] sm:$0xff]
    %v158 = vld [vmem:[#allocation5 + $0x138] sm:$0xff]
    %v159 = vld [vmem:[#allocation5 + $0x140] sm:$0xff]
    %v160 = vld [vmem:[#allocation5 + $0x148] sm:$0xff]
    %v161 = vld [vmem:[#allocation5 + $0x150] sm:$0xff]
    %v162 = vld [vmem:[#allocation5 + $0x158] sm:$0xff]
    %v163 = vld [vmem:[#allocation5 + $0x160] sm:$0xff]
    %v164 = vld [vmem:[#allocation5 + $0x168] sm:$0xff]
    %v165 = vld [vmem:[#allocation5 + $0x170] sm:$0xff]
    %v166 = vld [vmem:[#allocation5 + $0x178] sm:$0xff]
    %v167 = vld [vmem:[#allocation5 + $0x180] sm:$0xff]
    %v168 = vld [vmem:[#allocation5 + $0x188] sm:$0xff]
    %v169 = vld [vmem:[#allocation5 + $0x190] sm:$0xff]
    %v170 = vld [vmem:[#allocation5 + $0x198] sm:$0xff]
    %v171 = vld [vmem:[#allocation5 + $0x1a0] sm:$0xff]
    %v172 = vld [vmem:[#allocation5 + $0x1a8] sm:$0xff]
    %v173 = vld [vmem:[#allocation5 + $0x1b0] sm:$0xff]
    %v174 = vld [vmem:[#allocation5 + $0x1b8] sm:$0xff]
    %v175 = vld [vmem:[#allocation5 + $0x1c0] sm:$0xff]
    %v176 = vld [vmem:[#allocation5 + $0x1c8] sm:$0xff]
    %v177 = vld [vmem:[#allocation5 + $0x1d0] sm:$0xff]
    %v178 = vld [vmem:[#allocation5 + $0x1d8] sm:$0xff]
    %v179 = vld [vmem:[#allocation5 + $0x1e0] sm:$0xff]
    %v180 = vld [vmem:[#allocation5 + $0x1e8] sm:$0xff]
    %v181 = vld [vmem:[#allocation5 + $0x1f0] sm:$0xff]
    %v182 = vld [vmem:[#allocation5 + $0x1f8] sm:$0xff]
    %v183 = vld [vmem:[#allocation5 + $0x200] sm:$0xff]
    %v184 = vld [vmem:[#allocation5 + $0x208] sm:$0xff]
    %v185 = vld [vmem:[#allocation5 + $0x210] sm:$0xff]
    %v186 = vld [vmem:[#allocation5 + $0x218] sm:$0xff]
    %v187 = vld [vmem:[#allocation5 + $0x220] sm:$0xff]
    %v188 = vld [vmem:[#allocation5 + $0x228] sm:$0xff]
    %v189 = vld [vmem:[#allocation5 + $0x230] sm:$0xff]
    %v190 = vld [vmem:[#allocation5 + $0x238] sm:$0xff]
    %v191 = vld [vmem:[#allocation5 + $0x240] sm:$0xff]
    %v192 = vld [vmem:[#allocation5 + $0x248] sm:$0xff]
    %v193 = vld [vmem:[#allocation5 + $0x250] sm:$0xff]
    %v194 = vld [vmem:[#allocation5 + $0x258] sm:$0xff]
    %v195 = vld [vmem:[#allocation5 + $0x260] sm:$0xff]
    %v196 = vld [vmem:[#allocation5 + $0x268] sm:$0xff]
    %v197 = vld [vmem:[#allocation5 + $0x270] sm:$0xff]
    %v198 = vld [vmem:[#allocation5 + $0x278] sm:$0xff]
    %v199 = vld [vmem:[#allocation5 + $0x280] sm:$0xff]
    %v200 = vld [vmem:[#allocation5 + $0x288] sm:$0xff]
    %v201 = vld [vmem:[#allocation5 + $0x290] sm:$0xff]
    %v202 = vld [vmem:[#allocation5 + $0x298] sm:$0xff]
    %v203 = vld [vmem:[#allocation5 + $0x2a0] sm:$0xff]
    %v204 = vld [vmem:[#allocation5 + $0x2a8] sm:$0xff]
    %v205 = vld [vmem:[#allocation5 + $0x2b0] sm:$0xff]
    %v206 = vld [vmem:[#allocation5 + $0x2b8] sm:$0xff]
    %v207 = vld [vmem:[#allocation5 + $0x2c0] sm:$0xff]
    %v208 = vld [vmem:[#allocation5 + $0x2c8] sm:$0xff]
    %v209 = vld [vmem:[#allocation5 + $0x2d0] sm:$0xff]
    %v210 = vld [vmem:[#allocation5 + $0x2d8] sm:$0xff]
    %v211 = vld [vmem:[#allocation5 + $0x2e0] sm:$0xff]
    %v212 = vld [vmem:[#allocation5 + $0x2e8] sm:$0xff]
    %v213 = vld [vmem:[#allocation5 + $0x2f0] sm:$0xff]
    %v214 = vld [vmem:[#allocation5 + $0x2f8] sm:$0xff]
    %v215 = vld [vmem:[#allocation5 + $0x300] sm:$0xff]
    %v216 = vld [vmem:[#allocation5 + $0x308] sm:$0xff]
    %v217 = vld [vmem:[#allocation5 + $0x310] sm:$0xff]
    %v218 = vld [vmem:[#allocation5 + $0x318] sm:$0xff]
    %v219 = vld [vmem:[#allocation5 + $0x320] sm:$0xff]
    %v220 = vld [vmem:[#allocation5 + $0x328] sm:$0xff]
    %v221 = vld [vmem:[#allocation5 + $0x330] sm:$0xff]
    %v222 = vld [vmem:[#allocation5 + $0x338] sm:$0xff]
    %v223 = vld [vmem:[#allocation5 + $0x340] sm:$0xff]
    %v224 = vld [vmem:[#allocation5 + $0x348] sm:$0xff]
    %v225 = vld [vmem:[#allocation5 + $0x350] sm:$0xff]
    %v226 = vld [vmem:[#allocation5 + $0x358] sm:$0xff]
    %v227 = vld [vmem:[#allocation5 + $0x360] sm:$0xff]
    %v228 = vld [vmem:[#allocation5 + $0x368] sm:$0xff]
    %v229 = vld [vmem:[#allocation5 + $0x370] sm:$0xff]
    %v230 = vld [vmem:[#allocation5 + $0x378] sm:$0xff]
    %v231 = vld [vmem:[#allocation5 + $0x380] sm:$0xff]
    %v232 = vld [vmem:[#allocation5 + $0x388] sm:$0xff]
    %v233 = vld [vmem:[#allocation5 + $0x390] sm:$0xff]
    %v234 = vld [vmem:[#allocation5 + $0x398] sm:$0xff]
    %v235 = vld [vmem:[#allocation5 + $0x3a0] sm:$0xff]
    %v236 = vld [vmem:[#allocation5 + $0x3a8] sm:$0xff]
    %v237 = vld [vmem:[#allocation5 + $0x3b0] sm:$0xff]
    %v238 = vld [vmem:[#allocation5 + $0x3b8] sm:$0xff]
    %v239 = vld [vmem:[#allocation5 + $0x3c0] sm:$0xff]
    %v240 = vld [vmem:[#allocation5 + $0x3c8] sm:$0xff]
    %v241 = vld [vmem:[#allocation5 + $0x3d0] sm:$0xff]
    %v242 = vld [vmem:[#allocation5 + $0x3d8] sm:$0xff]
    %v243 = vld [vmem:[#allocation5 + $0x3e0] sm:$0xff]
    %v244 = vld [vmem:[#allocation5 + $0x3e8] sm:$0xff]
    %v245 = vld [vmem:[#allocation5 + $0x3f0] sm:$0xff]
    %v246 = vld [vmem:[#allocation5 + $0x3f8] sm:$0xff]
    %v247 = vld [vmem:[#allocation5 + $0x400] sm:$0xff]
    %v248 = vld [vmem:[#allocation5 + $0x408] sm:$0xff]
    %v249 = vld [vmem:[#allocation5 + $0x410] sm:$0xff]
    %v250 = vld [vmem:[#allocation5 + $0x418] sm:$0xff]
    %v251 = vld [vmem:[#allocation5 + $0x420] sm:$0xff]
    %v252 = vld [vmem:[#allocation5 + $0x428] sm:$0xff]
    %v253 = vld [vmem:[#allocation5 + $0x430] sm:$0xff]
    %v254 = vld [vmem:[#allocation5 + $0x438] sm:$0xff]
    %v255 = vld [vmem:[#allocation5 + $0x440] sm:$0xff]
    %v256 = vld [vmem:[#allocation5 + $0x448] sm:$0xff]
    %v257 = vld [vmem:[#allocation5 + $0x450] sm:$0xff]
    %v258 = vld [vmem:[#allocation5 + $0x458] sm:$0xff]
    %v259 = vld [vmem:[#allocation5 + $0x460] sm:$0xff]
    %v260 = vld [vmem:[#allocation5 + $0x468] sm:$0xff]
    %v261 = vld [vmem:[#allocation5 + $0x470] sm:$0xff]
    %v262 = vld [vmem:[#allocation5 + $0x478] sm:$0xff]
    %v263 = vld [vmem:[#allocation5 + $0x480] sm:$0xff]
    %v264 = vld [vmem:[#allocation5 + $0x488] sm:$0xff]
    %v265 = vld [vmem:[#allocation5 + $0x490] sm:$0xff]
    %v266 = vld [vmem:[#allocation5 + $0x498] sm:$0xff]
    %v267 = vld [vmem:[#allocation5 + $0x4a0] sm:$0xff]
    %v268 = vld [vmem:[#allocation5 + $0x4a8] sm:$0xff]
    %v269 = vld [vmem:[#allocation5 + $0x4b0] sm:$0xff]
    %v270 = vld [vmem:[#allocation5 + $0x4b8] sm:$0xff]
    %v271 = vld [vmem:[#allocation5 + $0x4c0] sm:$0xff]
    %v272 = vld [vmem:[#allocation5 + $0x4c8] sm:$0xff]
    %v273 = vld [vmem:[#allocation5 + $0x4d0] sm:$0xff]
    %v274 = vld [vmem:[#allocation5 + $0x4d8] sm:$0xff]
    %v275 = vld [vmem:[#allocation5 + $0x4e0] sm:$0xff]
    %v276 = vld [vmem:[#allocation5 + $0x4e8] sm:$0xff]
    %v277 = vld [vmem:[#allocation5 + $0x4f0] sm:$0xff]
    %v278 = vld [vmem:[#allocation5 + $0x4f8] sm:$0xff]
    %v279 = vld [vmem:[#allocation5 + $0x500] sm:$0xff]
    %v280 = vld [vmem:[#allocation5 + $0x508] sm:$0xff]
    %v281 = vld [vmem:[#allocation5 + $0x510] sm:$0xff]
    %v282 = vld [vmem:[#allocation5 + $0x518] sm:$0xff]
    %v283 = vld [vmem:[#allocation5 + $0x520] sm:$0xff]
    %v284 = vld [vmem:[#allocation5 + $0x528] sm:$0xff]
    %v285 = vld [vmem:[#allocation5 + $0x530] sm:$0xff]
    %v286 = vld [vmem:[#allocation5 + $0x538] sm:$0xff]
    %v287 = vld [vmem:[#allocation5 + $0x540] sm:$0xff]
    %v288 = vld [vmem:[#allocation5 + $0x548] sm:$0xff]
    %v289 = vld [vmem:[#allocation5 + $0x550] sm:$0xff]
    %v290 = vld [vmem:[#allocation5 + $0x558] sm:$0xff]
    %v291 = vld [vmem:[#allocation5 + $0x560] sm:$0xff]
    %v292 = vld [vmem:[#allocation5 + $0x568] sm:$0xff]
    %v293 = vld [vmem:[#allocation5 + $0x570] sm:$0xff]
    %v294 = vld [vmem:[#allocation5 + $0x578] sm:$0xff]
    %v295 = vld [vmem:[#allocation5 + $0x580] sm:$0xff]
    %v296 = vld [vmem:[#allocation5 + $0x588] sm:$0xff]
    %v297 = vld [vmem:[#allocation5 + $0x590] sm:$0xff]
    %v298 = vld [vmem:[#allocation5 + $0x598] sm:$0xff]
    %v299 = vld [vmem:[#allocation5 + $0x5a0] sm:$0xff]
    %v300 = vld [vmem:[#allocation5 + $0x5a8] sm:$0xff]
    %v301 = vld [vmem:[#allocation5 + $0x5b0] sm:$0xff]
    %v302 = vld [vmem:[#allocation5 + $0x5b8] sm:$0xff]
    %v303 = vld [vmem:[#allocation5 + $0x5c0] sm:$0xff]
    %v304 = vld [vmem:[#allocation5 + $0x5c8] sm:$0xff]
    %v305 = vld [vmem:[#allocation5 + $0x5d0] sm:$0xff]
    %v306 = vld [vmem:[#allocation5 + $0x5d8] sm:$0xff]
    %v307 = vld [vmem:[#allocation5 + $0x5e0] sm:$0xff]
    %v308 = vld [vmem:[#allocation5 + $0x5e8] sm:$0xff]
    %v309 = vld [vmem:[#allocation5 + $0x5f0] sm:$0xff]
    %v310 = vld [vmem:[#allocation5 + $0x5f8] sm:$0xff]
    %v311 = vld [vmem:[#allocation5 + $0x600] sm:$0xff]
    %v312 = vld [vmem:[#allocation5 + $0x608] sm:$0xff]
    %v313 = vld [vmem:[#allocation5 + $0x610] sm:$0xff]
    %v314 = vld [vmem:[#allocation5 + $0x618] sm:$0xff]
    %v315 = vld [vmem:[#allocation5 + $0x620] sm:$0xff]
    %v316 = vld [vmem:[#allocation5 + $0x628] sm:$0xff]
    %v317 = vld [vmem:[#allocation5 + $0x630] sm:$0xff]
    %v318 = vld [vmem:[#allocation5 + $0x638] sm:$0xff]
    %v319 = vld [vmem:[#allocation5 + $0x640] sm:$0xff]
    %v320 = vld [vmem:[#allocation5 + $0x648] sm:$0xff]
    %v321 = vld [vmem:[#allocation5 + $0x650] sm:$0xff]
    %v322 = vld [vmem:[#allocation5 + $0x658] sm:$0xff]
    %v323 = vld [vmem:[#allocation5 + $0x660] sm:$0xff]
    %v324 = vld [vmem:[#allocation5 + $0x668] sm:$0xff]
    %v325 = vld [vmem:[#allocation5 + $0x670] sm:$0xff]
    %v326 = vld [vmem:[#allocation5 + $0x678] sm:$0xff]
    %v327 = vld [vmem:[#allocation5 + $0x680] sm:$0xff]
    %v328 = vld [vmem:[#allocation5 + $0x688] sm:$0xff]
    %v329 = vld [vmem:[#allocation5 + $0x690] sm:$0xff]
    %v330 = vld [vmem:[#allocation5 + $0x698] sm:$0xff]
    %v331 = vld [vmem:[#allocation5 + $0x6a0] sm:$0xff]
    %v332 = vld [vmem:[#allocation5 + $0x6a8] sm:$0xff]
    %v333 = vld [vmem:[#allocation5 + $0x6b0] sm:$0xff]
    %v334 = vld [vmem:[#allocation5 + $0x6b8] sm:$0xff]
    %v335 = vld [vmem:[#allocation5 + $0x6c0] sm:$0xff]
    %v336 = vld [vmem:[#allocation5 + $0x6c8] sm:$0xff]
    %v337 = vld [vmem:[#allocation5 + $0x6d0] sm:$0xff]
    %v338 = vld [vmem:[#allocation5 + $0x6d8] sm:$0xff]
    %v339 = vld [vmem:[#allocation5 + $0x6e0] sm:$0xff]
    %v340 = vld [vmem:[#allocation5 + $0x6e8] sm:$0xff]
    %v341 = vld [vmem:[#allocation5 + $0x6f0] sm:$0xff]
    %v342 = vld [vmem:[#allocation5 + $0x6f8] sm:$0xff]
    %v343 = vld [vmem:[#allocation7] sm:$0xf]
    %v345 = vlaneseq
    %v346 = vshrl.u32 %v345, 7
    %v347 = vsub.s32 0, %v346
    %v348 = vrot.slane %v343, %v347
    %v349 = vlaneseq
    %v350 = vshrl.u32 %v349, 7
    %v351 = vsub.s32 1, %v350
    %v352 = vrot.slane %v343, %v351
    %v353 = vlaneseq
    %v354 = vshrl.u32 %v353, 7
    %v355 = vsub.s32 2, %v354
    %v356 = vrot.slane %v343, %v355
    %v357 = vlaneseq
    %v358 = vshrl.u32 %v357, 7
    %v359 = vsub.s32 3, %v358
    %v360 = vrot.slane %v343, %v359
    %v369 = vunpack.c.l.b16 %v115
    %v370 = vunpack.c.h.b16 %v115
    %v371 = vunpack.c.l.b16 %v116
    %v372 = vunpack.c.h.b16 %v116
    %v373 = vunpack.c.l.b16 %v117
    %v374 = vunpack.c.h.b16 %v117
    %v375 = vunpack.c.l.b16 %v118
    %v376 = vpack.c.b16 %v369, %v369
    %v377 = vpack.c.b16 %v370, %v370
    %v378 = vpack.c.b16 %v371, %v371
    %v379 = vpack.c.b16 %v372, %v372
    %v380 = vpack.c.b16 %v373, %v373
    %v381 = vpack.c.b16 %v374, %v374
    %v382 = vpack.c.b16 %v375, %v375
    %v614 = vunpack.c.l.b16 %v119
    %v615 = vunpack.c.h.b16 %v119
    %v616 = vunpack.c.l.b16 %v120
    %v617 = vunpack.c.h.b16 %v120
    %v618 = vunpack.c.l.b16 %v121
    %v619 = vunpack.c.h.b16 %v121
    %v620 = vunpack.c.l.b16 %v122
    %v621 = vunpack.c.h.b16 %v122
    %v622 = vunpack.c.l.b16 %v123
    %v623 = vunpack.c.h.b16 %v123
    %v624 = vunpack.c.l.b16 %v124
    %v625 = vunpack.c.h.b16 %v124
    %v626 = vunpack.c.l.b16 %v125
    %v627 = vunpack.c.h.b16 %v125
    %v628 = vunpack.c.l.b16 %v126
    %v629 = vunpack.c.h.b16 %v126
    %v630 = vunpack.c.l.b16 %v127
    %v631 = vunpack.c.h.b16 %v127
    %v632 = vunpack.c.l.b16 %v128
    %v633 = vunpack.c.h.b16 %v128
    %v634 = vunpack.c.l.b16 %v129
    %v635 = vunpack.c.h.b16 %v129
    %v636 = vunpack.c.l.b16 %v130
    %v637 = vunpack.c.h.b16 %v130
    %v638 = vunpack.c.l.b16 %v131
    %v639 = vunpack.c.h.b16 %v131
    %v640 = vunpack.c.l.b16 %v132
    %v641 = vunpack.c.h.b16 %v132
    %v642 = vunpack.c.l.b16 %v133
    %v643 = vunpack.c.h.b16 %v133
    %v644 = vunpack.c.l.b16 %v134
    %v645 = vunpack.c.h.b16 %v134
    %v646 = vunpack.c.l.b16 %v135
    %v647 = vunpack.c.h.b16 %v135
    %v648 = vunpack.c.l.b16 %v136
    %v649 = vunpack.c.h.b16 %v136
    %v650 = vunpack.c.l.b16 %v137
    %v651 = vunpack.c.h.b16 %v137
    %v652 = vunpack.c.l.b16 %v138
    %v653 = vunpack.c.h.b16 %v138
    %v654 = vunpack.c.l.b16 %v139
    %v655 = vunpack.c.h.b16 %v139
    %v656 = vunpack.c.l.b16 %v140
    %v657 = vunpack.c.h.b16 %v140
    %v658 = vunpack.c.l.b16 %v141
    %v659 = vunpack.c.h.b16 %v141
    %v660 = vunpack.c.l.b16 %v142
    %v661 = vunpack.c.h.b16 %v142
    %v662 = vunpack.c.l.b16 %v143
    %v663 = vunpack.c.h.b16 %v143
    %v664 = vunpack.c.l.b16 %v144
    %v665 = vunpack.c.h.b16 %v144
    %v666 = vunpack.c.l.b16 %v145
    %v667 = vunpack.c.h.b16 %v145
    %v668 = vunpack.c.l.b16 %v146
    %v669 = vunpack.c.h.b16 %v146
    %v670 = vunpack.c.l.b16 %v147
    %v671 = vunpack.c.h.b16 %v147
    %v672 = vunpack.c.l.b16 %v148
    %v673 = vunpack.c.h.b16 %v148
    %v674 = vunpack.c.l.b16 %v149
    %v675 = vunpack.c.h.b16 %v149
    %v676 = vunpack.c.l.b16 %v150
    %v677 = vunpack.c.h.b16 %v150
    %v678 = vunpack.c.l.b16 %v151
    %v679 = vunpack.c.h.b16 %v151
    %v680 = vunpack.c.l.b16 %v152
    %v681 = vunpack.c.h.b16 %v152
    %v682 = vunpack.c.l.b16 %v153
    %v683 = vunpack.c.h.b16 %v153
    %v684 = vunpack.c.l.b16 %v154
    %v685 = vunpack.c.h.b16 %v154
    %v686 = vunpack.c.l.b16 %v155
    %v687 = vunpack.c.h.b16 %v155
    %v688 = vunpack.c.l.b16 %v156
    %v689 = vunpack.c.h.b16 %v156
    %v690 = vunpack.c.l.b16 %v157
    %v691 = vunpack.c.h.b16 %v157
    %v692 = vunpack.c.l.b16 %v158
    %v693 = vunpack.c.h.b16 %v158
    %v694 = vunpack.c.l.b16 %v159
    %v695 = vunpack.c.h.b16 %v159
    %v696 = vunpack.c.l.b16 %v160
    %v697 = vunpack.c.h.b16 %v160
    %v698 = vunpack.c.l.b16 %v161
    %v699 = vunpack.c.h.b16 %v161
    %v700 = vunpack.c.l.b16 %v162
    %v701 = vunpack.c.h.b16 %v162
    %v702 = vunpack.c.l.b16 %v163
    %v703 = vunpack.c.h.b16 %v163
    %v704 = vunpack.c.l.b16 %v164
    %v705 = vunpack.c.h.b16 %v164
    %v706 = vunpack.c.l.b16 %v165
    %v707 = vunpack.c.h.b16 %v165
    %v708 = vunpack.c.l.b16 %v166
    %v709 = vunpack.c.h.b16 %v166
    %v710 = vunpack.c.l.b16 %v167
    %v711 = vunpack.c.h.b16 %v167
    %v712 = vunpack.c.l.b16 %v168
    %v713 = vunpack.c.h.b16 %v168
    %v714 = vunpack.c.l.b16 %v169
    %v715 = vunpack.c.h.b16 %v169
    %v716 = vunpack.c.l.b16 %v170
    %v717 = vunpack.c.h.b16 %v170
    %v718 = vunpack.c.l.b16 %v171
    %v719 = vunpack.c.h.b16 %v171
    %v720 = vunpack.c.l.b16 %v172
    %v721 = vunpack.c.h.b16 %v172
    %v722 = vunpack.c.l.b16 %v173
    %v723 = vunpack.c.h.b16 %v173
    %v724 = vunpack.c.l.b16 %v174
    %v725 = vunpack.c.h.b16 %v174
    %v726 = vunpack.c.l.b16 %v175
    %v727 = vunpack.c.h.b16 %v175
    %v728 = vunpack.c.l.b16 %v176
    %v729 = vunpack.c.h.b16 %v176
    %v730 = vunpack.c.l.b16 %v177
    %v731 = vunpack.c.h.b16 %v177
    %v732 = vunpack.c.l.b16 %v178
    %v733 = vunpack.c.h.b16 %v178
    %v734 = vunpack.c.l.b16 %v179
    %v735 = vunpack.c.h.b16 %v179
    %v736 = vunpack.c.l.b16 %v180
    %v737 = vunpack.c.h.b16 %v180
    %v738 = vunpack.c.l.b16 %v181
    %v739 = vunpack.c.h.b16 %v181
    %v740 = vunpack.c.l.b16 %v182
    %v741 = vunpack.c.h.b16 %v182
    %v742 = vunpack.c.l.b16 %v183
    %v743 = vunpack.c.h.b16 %v183
    %v744 = vunpack.c.l.b16 %v184
    %v745 = vunpack.c.h.b16 %v184
    %v746 = vunpack.c.l.b16 %v185
    %v747 = vunpack.c.h.b16 %v185
    %v748 = vunpack.c.l.b16 %v186
    %v749 = vunpack.c.h.b16 %v186
    %v750 = vunpack.c.l.b16 %v187
    %v751 = vunpack.c.h.b16 %v187
    %v752 = vunpack.c.l.b16 %v188
    %v753 = vunpack.c.h.b16 %v188
    %v754 = vunpack.c.l.b16 %v189
    %v755 = vunpack.c.h.b16 %v189
    %v756 = vunpack.c.l.b16 %v190
    %v757 = vunpack.c.h.b16 %v190
    %v758 = vunpack.c.l.b16 %v191
    %v759 = vunpack.c.h.b16 %v191
    %v760 = vunpack.c.l.b16 %v192
    %v761 = vunpack.c.h.b16 %v192
    %v762 = vunpack.c.l.b16 %v193
    %v763 = vunpack.c.h.b16 %v193
    %v764 = vunpack.c.l.b16 %v194
    %v765 = vunpack.c.h.b16 %v194
    %v766 = vunpack.c.l.b16 %v195
    %v767 = vunpack.c.h.b16 %v195
    %v768 = vunpack.c.l.b16 %v196
    %v769 = vunpack.c.h.b16 %v196
    %v770 = vunpack.c.l.b16 %v197
    %v771 = vunpack.c.h.b16 %v197
    %v772 = vunpack.c.l.b16 %v198
    %v773 = vunpack.c.h.b16 %v198
    %v774 = vunpack.c.l.b16 %v199
    %v775 = vunpack.c.h.b16 %v199
    %v776 = vunpack.c.l.b16 %v200
    %v777 = vunpack.c.h.b16 %v200
    %v778 = vunpack.c.l.b16 %v201
    %v779 = vunpack.c.h.b16 %v201
    %v780 = vunpack.c.l.b16 %v202
    %v781 = vunpack.c.h.b16 %v202
    %v782 = vunpack.c.l.b16 %v203
    %v783 = vunpack.c.h.b16 %v203
    %v784 = vunpack.c.l.b16 %v204
    %v785 = vunpack.c.h.b16 %v204
    %v786 = vunpack.c.l.b16 %v205
    %v787 = vunpack.c.h.b16 %v205
    %v788 = vunpack.c.l.b16 %v206
    %v789 = vunpack.c.h.b16 %v206
    %v790 = vunpack.c.l.b16 %v207
    %v791 = vunpack.c.h.b16 %v207
    %v792 = vunpack.c.l.b16 %v208
    %v793 = vunpack.c.h.b16 %v208
    %v794 = vunpack.c.l.b16 %v209
    %v795 = vunpack.c.h.b16 %v209
    %v796 = vunpack.c.l.b16 %v210
    %v797 = vunpack.c.h.b16 %v210
    %v798 = vunpack.c.l.b16 %v211
    %v799 = vunpack.c.h.b16 %v211
    %v800 = vunpack.c.l.b16 %v212
    %v801 = vunpack.c.h.b16 %v212
    %v802 = vunpack.c.l.b16 %v213
    %v803 = vunpack.c.h.b16 %v213
    %v804 = vunpack.c.l.b16 %v214
    %v805 = vunpack.c.h.b16 %v214
    %v806 = vunpack.c.l.b16 %v215
    %v807 = vunpack.c.h.b16 %v215
    %v808 = vunpack.c.l.b16 %v216
    %v809 = vunpack.c.h.b16 %v216
    %v810 = vunpack.c.l.b16 %v217
    %v811 = vunpack.c.h.b16 %v217
    %v812 = vunpack.c.l.b16 %v218
    %v813 = vunpack.c.h.b16 %v218
    %v814 = vunpack.c.l.b16 %v219
    %v815 = vunpack.c.h.b16 %v219
    %v816 = vunpack.c.l.b16 %v220
    %v817 = vunpack.c.h.b16 %v220
    %v818 = vunpack.c.l.b16 %v221
    %v819 = vunpack.c.h.b16 %v221
    %v820 = vunpack.c.l.b16 %v222
    %v821 = vunpack.c.h.b16 %v222
    %v822 = vunpack.c.l.b16 %v223
    %v823 = vunpack.c.h.b16 %v223
    %v824 = vunpack.c.l.b16 %v224
    %v825 = vunpack.c.h.b16 %v224
    %v826 = vunpack.c.l.b16 %v225
    %v827 = vunpack.c.h.b16 %v225
    %v828 = vunpack.c.l.b16 %v226
    %v829 = vunpack.c.h.b16 %v226
    %v830 = vunpack.c.l.b16 %v227
    %v831 = vunpack.c.h.b16 %v227
    %v832 = vunpack.c.l.b16 %v228
    %v833 = vunpack.c.h.b16 %v228
    %v834 = vunpack.c.l.b16 %v229
    %v835 = vunpack.c.h.b16 %v229
    %v836 = vunpack.c.l.b16 %v230
    %v837 = vunpack.c.h.b16 %v230
    %v838 = vunpack.c.l.b16 %v231
    %v839 = vunpack.c.h.b16 %v231
    %v840 = vunpack.c.l.b16 %v232
    %v841 = vunpack.c.h.b16 %v232
    %v842 = vunpack.c.l.b16 %v233
    %v843 = vunpack.c.h.b16 %v233
    %v844 = vunpack.c.l.b16 %v234
    %v845 = vunpack.c.h.b16 %v234
    %v846 = vunpack.c.l.b16 %v235
    %v847 = vunpack.c.h.b16 %v235
    %v848 = vunpack.c.l.b16 %v236
    %v849 = vunpack.c.h.b16 %v236
    %v850 = vunpack.c.l.b16 %v237
    %v851 = vunpack.c.h.b16 %v237
    %v852 = vunpack.c.l.b16 %v238
    %v853 = vunpack.c.h.b16 %v238
    %v854 = vunpack.c.l.b16 %v239
    %v855 = vunpack.c.h.b16 %v239
    %v856 = vunpack.c.l.b16 %v240
    %v857 = vunpack.c.h.b16 %v240
    %v858 = vunpack.c.l.b16 %v241
    %v859 = vunpack.c.h.b16 %v241
    %v860 = vunpack.c.l.b16 %v242
    %v861 = vunpack.c.h.b16 %v242
    %v862 = vunpack.c.l.b16 %v243
    %v863 = vunpack.c.h.b16 %v243
    %v864 = vunpack.c.l.b16 %v244
    %v865 = vunpack.c.h.b16 %v244
    %v866 = vunpack.c.l.b16 %v245
    %v867 = vunpack.c.h.b16 %v245
    %v868 = vunpack.c.l.b16 %v246
    %v869 = vunpack.c.h.b16 %v246
    %v870 = vunpack.c.l.b16 %v247
    %v871 = vunpack.c.h.b16 %v247
    %v872 = vunpack.c.l.b16 %v248
    %v873 = vunpack.c.h.b16 %v248
    %v874 = vunpack.c.l.b16 %v249
    %v875 = vunpack.c.h.b16 %v249
    %v876 = vunpack.c.l.b16 %v250
    %v877 = vunpack.c.h.b16 %v250
    %v878 = vunpack.c.l.b16 %v251
    %v879 = vunpack.c.h.b16 %v251
    %v880 = vunpack.c.l.b16 %v252
    %v881 = vunpack.c.h.b16 %v252
    %v882 = vunpack.c.l.b16 %v253
    %v883 = vunpack.c.h.b16 %v253
    %v884 = vunpack.c.l.b16 %v254
    %v885 = vunpack.c.h.b16 %v254
    %v886 = vunpack.c.l.b16 %v255
    %v887 = vunpack.c.h.b16 %v255
    %v888 = vunpack.c.l.b16 %v256
    %v889 = vunpack.c.h.b16 %v256
    %v890 = vunpack.c.l.b16 %v257
    %v891 = vunpack.c.h.b16 %v257
    %v892 = vunpack.c.l.b16 %v258
    %v893 = vunpack.c.h.b16 %v258
    %v894 = vunpack.c.l.b16 %v259
    %v895 = vunpack.c.h.b16 %v259
    %v896 = vunpack.c.l.b16 %v260
    %v897 = vunpack.c.h.b16 %v260
    %v898 = vunpack.c.l.b16 %v261
    %v899 = vunpack.c.h.b16 %v261
    %v900 = vunpack.c.l.b16 %v262
    %v901 = vunpack.c.h.b16 %v262
    %v902 = vunpack.c.l.b16 %v263
    %v903 = vunpack.c.h.b16 %v263
    %v904 = vunpack.c.l.b16 %v264
    %v905 = vunpack.c.h.b16 %v264
    %v906 = vunpack.c.l.b16 %v265
    %v907 = vunpack.c.h.b16 %v265
    %v908 = vunpack.c.l.b16 %v266
    %v909 = vunpack.c.h.b16 %v266
    %v910 = vunpack.c.l.b16 %v267
    %v911 = vunpack.c.h.b16 %v267
    %v912 = vunpack.c.l.b16 %v268
    %v913 = vunpack.c.h.b16 %v268
    %v914 = vunpack.c.l.b16 %v269
    %v915 = vunpack.c.h.b16 %v269
    %v916 = vunpack.c.l.b16 %v270
    %v917 = vunpack.c.h.b16 %v270
    %v918 = vunpack.c.l.b16 %v271
    %v919 = vunpack.c.h.b16 %v271
    %v920 = vunpack.c.l.b16 %v272
    %v921 = vunpack.c.h.b16 %v272
    %v922 = vunpack.c.l.b16 %v273
    %v923 = vunpack.c.h.b16 %v273
    %v924 = vunpack.c.l.b16 %v274
    %v925 = vunpack.c.h.b16 %v274
    %v926 = vunpack.c.l.b16 %v275
    %v927 = vunpack.c.h.b16 %v275
    %v928 = vunpack.c.l.b16 %v276
    %v929 = vunpack.c.h.b16 %v276
    %v930 = vunpack.c.l.b16 %v277
    %v931 = vunpack.c.h.b16 %v277
    %v932 = vunpack.c.l.b16 %v278
    %v933 = vunpack.c.h.b16 %v278
    %v934 = vunpack.c.l.b16 %v279
    %v935 = vunpack.c.h.b16 %v279
    %v936 = vunpack.c.l.b16 %v280
    %v937 = vunpack.c.h.b16 %v280
    %v938 = vunpack.c.l.b16 %v281
    %v939 = vunpack.c.h.b16 %v281
    %v940 = vunpack.c.l.b16 %v282
    %v941 = vunpack.c.h.b16 %v282
    %v942 = vunpack.c.l.b16 %v283
    %v943 = vunpack.c.h.b16 %v283
    %v944 = vunpack.c.l.b16 %v284
    %v945 = vunpack.c.h.b16 %v284
    %v946 = vunpack.c.l.b16 %v285
    %v947 = vunpack.c.h.b16 %v285
    %v948 = vunpack.c.l.b16 %v286
    %v949 = vunpack.c.h.b16 %v286
    %v950 = vunpack.c.l.b16 %v287
    %v951 = vunpack.c.h.b16 %v287
    %v952 = vunpack.c.l.b16 %v288
    %v953 = vunpack.c.h.b16 %v288
    %v954 = vunpack.c.l.b16 %v289
    %v955 = vunpack.c.h.b16 %v289
    %v956 = vunpack.c.l.b16 %v290
    %v957 = vunpack.c.h.b16 %v290
    %v958 = vunpack.c.l.b16 %v291
    %v959 = vunpack.c.h.b16 %v291
    %v960 = vunpack.c.l.b16 %v292
    %v961 = vunpack.c.h.b16 %v292
    %v962 = vunpack.c.l.b16 %v293
    %v963 = vunpack.c.h.b16 %v293
    %v964 = vunpack.c.l.b16 %v294
    %v965 = vunpack.c.h.b16 %v294
    %v966 = vunpack.c.l.b16 %v295
    %v967 = vunpack.c.h.b16 %v295
    %v968 = vunpack.c.l.b16 %v296
    %v969 = vunpack.c.h.b16 %v296
    %v970 = vunpack.c.l.b16 %v297
    %v971 = vunpack.c.h.b16 %v297
    %v972 = vunpack.c.l.b16 %v298
    %v973 = vunpack.c.h.b16 %v298
    %v974 = vunpack.c.l.b16 %v299
    %v975 = vunpack.c.h.b16 %v299
    %v976 = vunpack.c.l.b16 %v300
    %v977 = vunpack.c.h.b16 %v300
    %v978 = vunpack.c.l.b16 %v301
    %v979 = vunpack.c.h.b16 %v301
    %v980 = vunpack.c.l.b16 %v302
    %v981 = vunpack.c.h.b16 %v302
    %v982 = vunpack.c.l.b16 %v303
    %v983 = vunpack.c.h.b16 %v303
    %v984 = vunpack.c.l.b16 %v304
    %v985 = vunpack.c.h.b16 %v304
    %v986 = vunpack.c.l.b16 %v305
    %v987 = vunpack.c.h.b16 %v305
    %v988 = vunpack.c.l.b16 %v306
    %v989 = vunpack.c.h.b16 %v306
    %v990 = vunpack.c.l.b16 %v307
    %v991 = vunpack.c.h.b16 %v307
    %v992 = vunpack.c.l.b16 %v308
    %v993 = vunpack.c.h.b16 %v308
    %v994 = vunpack.c.l.b16 %v309
    %v995 = vunpack.c.h.b16 %v309
    %v996 = vunpack.c.l.b16 %v310
    %v997 = vunpack.c.h.b16 %v310
    %v998 = vunpack.c.l.b16 %v311
    %v999 = vunpack.c.h.b16 %v311
    %v1000 = vunpack.c.l.b16 %v312
    %v1001 = vunpack.c.h.b16 %v312
    %v1002 = vunpack.c.l.b16 %v313
    %v1003 = vunpack.c.h.b16 %v313
    %v1004 = vunpack.c.l.b16 %v314
    %v1005 = vunpack.c.h.b16 %v314
    %v1006 = vunpack.c.l.b16 %v315
    %v1007 = vunpack.c.h.b16 %v315
    %v1008 = vunpack.c.l.b16 %v316
    %v1009 = vunpack.c.h.b16 %v316
    %v1010 = vunpack.c.l.b16 %v317
    %v1011 = vunpack.c.h.b16 %v317
    %v1012 = vunpack.c.l.b16 %v318
    %v1013 = vunpack.c.h.b16 %v318
    %v1014 = vunpack.c.l.b16 %v319
    %v1015 = vunpack.c.h.b16 %v319
    %v1016 = vunpack.c.l.b16 %v320
    %v1017 = vunpack.c.h.b16 %v320
    %v1018 = vunpack.c.l.b16 %v321
    %v1019 = vunpack.c.h.b16 %v321
    %v1020 = vunpack.c.l.b16 %v322
    %v1021 = vunpack.c.h.b16 %v322
    %v1022 = vunpack.c.l.b16 %v323
    %v1023 = vunpack.c.h.b16 %v323
    %v1024 = vunpack.c.l.b16 %v324
    %v1025 = vunpack.c.h.b16 %v324
    %v1026 = vunpack.c.l.b16 %v325
    %v1027 = vunpack.c.h.b16 %v325
    %v1028 = vunpack.c.l.b16 %v326
    %v1029 = vunpack.c.h.b16 %v326
    %v1030 = vunpack.c.l.b16 %v327
    %v1031 = vunpack.c.h.b16 %v327
    %v1032 = vunpack.c.l.b16 %v328
    %v1033 = vunpack.c.h.b16 %v328
    %v1034 = vunpack.c.l.b16 %v329
    %v1035 = vunpack.c.h.b16 %v329
    %v1036 = vunpack.c.l.b16 %v330
    %v1037 = vunpack.c.h.b16 %v330
    %v1038 = vunpack.c.l.b16 %v331
    %v1039 = vunpack.c.h.b16 %v331
    %v1040 = vunpack.c.l.b16 %v332
    %v1041 = vunpack.c.h.b16 %v332
    %v1042 = vunpack.c.l.b16 %v333
    %v1043 = vunpack.c.h.b16 %v333
    %v1044 = vunpack.c.l.b16 %v334
    %v1045 = vunpack.c.h.b16 %v334
    %v1046 = vunpack.c.l.b16 %v335
    %v1047 = vunpack.c.h.b16 %v335
    %v1048 = vunpack.c.l.b16 %v336
    %v1049 = vunpack.c.h.b16 %v336
    %v1050 = vunpack.c.l.b16 %v337
    %v1051 = vunpack.c.h.b16 %v337
    %v1052 = vunpack.c.l.b16 %v338
    %v1053 = vunpack.c.h.b16 %v338
    %v1054 = vunpack.c.l.b16 %v339
    %v1055 = vunpack.c.h.b16 %v339
    %v1056 = vunpack.c.l.b16 %v340
    %v1057 = vunpack.c.h.b16 %v340
    %v1058 = vunpack.c.l.b16 %v341
    %v1059 = vunpack.c.h.b16 %v341
    %v1060 = vunpack.c.l.b16 %v342
    %v1061 = vunpack.c.h.b16 %v342
    %v1062 = vpack.c.b16 %v618, %v614
    %v1063 = vpack.c.b16 %v619, %v615
    %v1064 = vpack.c.b16 %v620, %v616
    %v1065 = vpack.c.b16 %v621, %v617
    %v1066 = vpack.c.b16 %v626, %v622
    %v1067 = vpack.c.b16 %v627, %v623
    %v1068 = vpack.c.b16 %v628, %v624
    %v1069 = vpack.c.b16 %v629, %v625
    %v1070 = vpack.c.b16 %v634, %v630
    %v1071 = vpack.c.b16 %v635, %v631
    %v1072 = vpack.c.b16 %v636, %v632
    %v1073 = vpack.c.b16 %v637, %v633
    %v1074 = vpack.c.b16 %v642, %v638
    %v1075 = vpack.c.b16 %v643, %v639
    %v1076 = vpack.c.b16 %v644, %v640
    %v1077 = vpack.c.b16 %v645, %v641
    %v1078 = vpack.c.b16 %v650, %v646
    %v1079 = vpack.c.b16 %v651, %v647
    %v1080 = vpack.c.b16 %v652, %v648
    %v1081 = vpack.c.b16 %v653, %v649
    %v1082 = vpack.c.b16 %v658, %v654
    %v1083 = vpack.c.b16 %v659, %v655
    %v1084 = vpack.c.b16 %v660, %v656
    %v1085 = vpack.c.b16 %v661, %v657
    %v1086 = vpack.c.b16 %v666, %v662
    %v1087 = vpack.c.b16 %v667, %v663
    %v1088 = vpack.c.b16 %v668, %v664
    %v1089 = vpack.c.b16 %v669, %v665
    %v1090 = vpack.c.b16 %v674, %v670
    %v1091 = vpack.c.b16 %v675, %v671
    %v1092 = vpack.c.b16 %v676, %v672
    %v1093 = vpack.c.b16 %v677, %v673
    %v1094 = vpack.c.b16 %v682, %v678
    %v1095 = vpack.c.b16 %v683, %v679
    %v1096 = vpack.c.b16 %v684, %v680
    %v1097 = vpack.c.b16 %v685, %v681
    %v1098 = vpack.c.b16 %v690, %v686
    %v1099 = vpack.c.b16 %v691, %v687
    %v1100 = vpack.c.b16 %v692, %v688
    %v1101 = vpack.c.b16 %v693, %v689
    %v1102 = vpack.c.b16 %v698, %v694
    %v1103 = vpack.c.b16 %v699, %v695
    %v1104 = vpack.c.b16 %v700, %v696
    %v1105 = vpack.c.b16 %v701, %v697
    %v1106 = vpack.c.b16 %v706, %v702
    %v1107 = vpack.c.b16 %v707, %v703
    %v1108 = vpack.c.b16 %v708, %v704
    %v1109 = vpack.c.b16 %v709, %v705
    %v1110 = vpack.c.b16 %v714, %v710
    %v1111 = vpack.c.b16 %v715, %v711
    %v1112 = vpack.c.b16 %v716, %v712
    %v1113 = vpack.c.b16 %v717, %v713
    %v1114 = vpack.c.b16 %v722, %v718
    %v1115 = vpack.c.b16 %v723, %v719
    %v1116 = vpack.c.b16 %v724, %v720
    %v1117 = vpack.c.b16 %v725, %v721
    %v1118 = vpack.c.b16 %v730, %v726
    %v1119 = vpack.c.b16 %v731, %v727
    %v1120 = vpack.c.b16 %v732, %v728
    %v1121 = vpack.c.b16 %v733, %v729
    %v1122 = vpack.c.b16 %v738, %v734
    %v1123 = vpack.c.b16 %v739, %v735
    %v1124 = vpack.c.b16 %v740, %v736
    %v1125 = vpack.c.b16 %v741, %v737
    %v1126 = vpack.c.b16 %v746, %v742
    %v1127 = vpack.c.b16 %v747, %v743
    %v1128 = vpack.c.b16 %v748, %v744
    %v1129 = vpack.c.b16 %v749, %v745
    %v1130 = vpack.c.b16 %v754, %v750
    %v1131 = vpack.c.b16 %v755, %v751
    %v1132 = vpack.c.b16 %v756, %v752
    %v1133 = vpack.c.b16 %v757, %v753
    %v1134 = vpack.c.b16 %v762, %v758
    %v1135 = vpack.c.b16 %v763, %v759
    %v1136 = vpack.c.b16 %v764, %v760
    %v1137 = vpack.c.b16 %v765, %v761
    %v1138 = vpack.c.b16 %v770, %v766
    %v1139 = vpack.c.b16 %v771, %v767
    %v1140 = vpack.c.b16 %v772, %v768
    %v1141 = vpack.c.b16 %v773, %v769
    %v1142 = vpack.c.b16 %v778, %v774
    %v1143 = vpack.c.b16 %v779, %v775
    %v1144 = vpack.c.b16 %v780, %v776
    %v1145 = vpack.c.b16 %v781, %v777
    %v1146 = vpack.c.b16 %v786, %v782
    %v1147 = vpack.c.b16 %v787, %v783
    %v1148 = vpack.c.b16 %v788, %v784
    %v1149 = vpack.c.b16 %v789, %v785
    %v1150 = vpack.c.b16 %v794, %v790
    %v1151 = vpack.c.b16 %v795, %v791
    %v1152 = vpack.c.b16 %v796, %v792
    %v1153 = vpack.c.b16 %v797, %v793
    %v1154 = vpack.c.b16 %v802, %v798
    %v1155 = vpack.c.b16 %v803, %v799
    %v1156 = vpack.c.b16 %v804, %v800
    %v1157 = vpack.c.b16 %v805, %v801
    %v1158 = vpack.c.b16 %v810, %v806
    %v1159 = vpack.c.b16 %v811, %v807
    %v1160 = vpack.c.b16 %v812, %v808
    %v1161 = vpack.c.b16 %v813, %v809
    %v1162 = vpack.c.b16 %v818, %v814
    %v1163 = vpack.c.b16 %v819, %v815
    %v1164 = vpack.c.b16 %v820, %v816
    %v1165 = vpack.c.b16 %v821, %v817
    %v1166 = vpack.c.b16 %v826, %v822
    %v1167 = vpack.c.b16 %v827, %v823
    %v1168 = vpack.c.b16 %v828, %v824
    %v1169 = vpack.c.b16 %v829, %v825
    %v1170 = vpack.c.b16 %v834, %v830
    %v1171 = vpack.c.b16 %v835, %v831
    %v1172 = vpack.c.b16 %v836, %v832
    %v1173 = vpack.c.b16 %v837, %v833
    %v1174 = vpack.c.b16 %v842, %v838
    %v1175 = vpack.c.b16 %v843, %v839
    %v1176 = vpack.c.b16 %v844, %v840
    %v1177 = vpack.c.b16 %v845, %v841
    %v1178 = vpack.c.b16 %v850, %v846
    %v1179 = vpack.c.b16 %v851, %v847
    %v1180 = vpack.c.b16 %v852, %v848
    %v1181 = vpack.c.b16 %v853, %v849
    %v1182 = vpack.c.b16 %v858, %v854
    %v1183 = vpack.c.b16 %v859, %v855
    %v1184 = vpack.c.b16 %v860, %v856
    %v1185 = vpack.c.b16 %v861, %v857
    %v1186 = vpack.c.b16 %v866, %v862
    %v1187 = vpack.c.b16 %v867, %v863
    %v1188 = vpack.c.b16 %v868, %v864
    %v1189 = vpack.c.b16 %v869, %v865
    %v1190 = vpack.c.b16 %v874, %v870
    %v1191 = vpack.c.b16 %v875, %v871
    %v1192 = vpack.c.b16 %v876, %v872
    %v1193 = vpack.c.b16 %v877, %v873
    %v1194 = vpack.c.b16 %v882, %v878
    %v1195 = vpack.c.b16 %v883, %v879
    %v1196 = vpack.c.b16 %v884, %v880
    %v1197 = vpack.c.b16 %v885, %v881
    %v1198 = vpack.c.b16 %v890, %v886
    %v1199 = vpack.c.b16 %v891, %v887
    %v1200 = vpack.c.b16 %v892, %v888
    %v1201 = vpack.c.b16 %v893, %v889
    %v1202 = vpack.c.b16 %v898, %v894
    %v1203 = vpack.c.b16 %v899, %v895
    %v1204 = vpack.c.b16 %v900, %v896
    %v1205 = vpack.c.b16 %v901, %v897
    %v1206 = vpack.c.b16 %v906, %v902
    %v1207 = vpack.c.b16 %v907, %v903
    %v1208 = vpack.c.b16 %v908, %v904
    %v1209 = vpack.c.b16 %v909, %v905
    %v1210 = vpack.c.b16 %v914, %v910
    %v1211 = vpack.c.b16 %v915, %v911
    %v1212 = vpack.c.b16 %v916, %v912
    %v1213 = vpack.c.b16 %v917, %v913
    %v1214 = vpack.c.b16 %v922, %v918
    %v1215 = vpack.c.b16 %v923, %v919
    %v1216 = vpack.c.b16 %v924, %v920
    %v1217 = vpack.c.b16 %v925, %v921
    %v1218 = vpack.c.b16 %v930, %v926
    %v1219 = vpack.c.b16 %v931, %v927
    %v1220 = vpack.c.b16 %v932, %v928
    %v1221 = vpack.c.b16 %v933, %v929
    %v1222 = vpack.c.b16 %v938, %v934
    %v1223 = vpack.c.b16 %v939, %v935
    %v1224 = vpack.c.b16 %v940, %v936
    %v1225 = vpack.c.b16 %v941, %v937
    %v1226 = vpack.c.b16 %v946, %v942
    %v1227 = vpack.c.b16 %v947, %v943
    %v1228 = vpack.c.b16 %v948, %v944
    %v1229 = vpack.c.b16 %v949, %v945
    %v1230 = vpack.c.b16 %v954, %v950
    %v1231 = vpack.c.b16 %v955, %v951
    %v1232 = vpack.c.b16 %v956, %v952
    %v1233 = vpack.c.b16 %v957, %v953
    %v1234 = vpack.c.b16 %v962, %v958
    %v1235 = vpack.c.b16 %v963, %v959
    %v1236 = vpack.c.b16 %v964, %v960
    %v1237 = vpack.c.b16 %v965, %v961
    %v1238 = vpack.c.b16 %v970, %v966
    %v1239 = vpack.c.b16 %v971, %v967
    %v1240 = vpack.c.b16 %v972, %v968
    %v1241 = vpack.c.b16 %v973, %v969
    %v1242 = vpack.c.b16 %v978, %v974
    %v1243 = vpack.c.b16 %v979, %v975
    %v1244 = vpack.c.b16 %v980, %v976
    %v1245 = vpack.c.b16 %v981, %v977
    %v1246 = vpack.c.b16 %v986, %v982
    %v1247 = vpack.c.b16 %v987, %v983
    %v1248 = vpack.c.b16 %v988, %v984
    %v1249 = vpack.c.b16 %v989, %v985
    %v1250 = vpack.c.b16 %v994, %v990
    %v1251 = vpack.c.b16 %v995, %v991
    %v1252 = vpack.c.b16 %v996, %v992
    %v1253 = vpack.c.b16 %v997, %v993
    %v1254 = vpack.c.b16 %v1002, %v998
    %v1255 = vpack.c.b16 %v1003, %v999
    %v1256 = vpack.c.b16 %v1004, %v1000
    %v1257 = vpack.c.b16 %v1005, %v1001
    %v1258 = vpack.c.b16 %v1010, %v1006
    %v1259 = vpack.c.b16 %v1011, %v1007
    %v1260 = vpack.c.b16 %v1012, %v1008
    %v1261 = vpack.c.b16 %v1013, %v1009
    %v1262 = vpack.c.b16 %v1018, %v1014
    %v1263 = vpack.c.b16 %v1019, %v1015
    %v1264 = vpack.c.b16 %v1020, %v1016
    %v1265 = vpack.c.b16 %v1021, %v1017
    %v1266 = vpack.c.b16 %v1026, %v1022
    %v1267 = vpack.c.b16 %v1027, %v1023
    %v1268 = vpack.c.b16 %v1028, %v1024
    %v1269 = vpack.c.b16 %v1029, %v1025
    %v1270 = vpack.c.b16 %v1034, %v1030
    %v1271 = vpack.c.b16 %v1035, %v1031
    %v1272 = vpack.c.b16 %v1036, %v1032
    %v1273 = vpack.c.b16 %v1037, %v1033
    %v1274 = vpack.c.b16 %v1042, %v1038
    %v1275 = vpack.c.b16 %v1043, %v1039
    %v1276 = vpack.c.b16 %v1044, %v1040
    %v1277 = vpack.c.b16 %v1045, %v1041
    %v1278 = vpack.c.b16 %v1050, %v1046
    %v1279 = vpack.c.b16 %v1051, %v1047
    %v1280 = vpack.c.b16 %v1052, %v1048
    %v1281 = vpack.c.b16 %v1053, %v1049
    %v1282 = vpack.c.b16 %v1058, %v1054
    %v1283 = vpack.c.b16 %v1059, %v1055
    %v1284 = vpack.c.b16 %v1060, %v1056
    %v1285 = vpack.c.b16 %v1061, %v1057
    %1510 = vmatprep.subr.bf16.mxu0 %v1063
    %1511 = vmatpush1.bf16.msra.mxu0 %v1062
    %1512 = vmatprep.subr.bf16.mxu0 %v1067
    %1513 = vmatpush1.bf16.msra.mxu0 %v1066
    %1514 = vmatprep.subr.bf16.mxu0 %v1071
    %1515 = vmatpush1.bf16.msra.mxu0 %v1070
    %1516 = vmatprep.subr.bf16.mxu0 %v1075
    %1517 = vmatpush1.bf16.msra.mxu0 %v1074
    %1518 = vmatprep.subr.bf16.mxu0 %v1079
    %1519 = vmatpush1.bf16.msra.mxu0 %v1078
    %1520 = vmatprep.subr.bf16.mxu0 %v1083
    %1521 = vmatpush1.bf16.msra.mxu0 %v1082
    %1522 = vmatprep.subr.bf16.mxu0 %v1087
    %1523 = vmatpush1.bf16.msra.mxu0 %v1086
    %1524 = vmatprep.subr.bf16.mxu0 %v1091
    %1525 = vmatpush1.bf16.msra.mxu0 %v1090
    %1526 = vmatprep.subr.bf16.mxu0 %v1095
    %1527 = vmatpush1.bf16.msra.mxu0 %v1094
    %1528 = vmatprep.subr.bf16.mxu0 %v1099
    %1529 = vmatpush1.bf16.msra.mxu0 %v1098
    %1530 = vmatprep.subr.bf16.mxu0 %v1103
    %1531 = vmatpush1.bf16.msra.mxu0 %v1102
    %1532 = vmatprep.subr.bf16.mxu0 %v1107
    %1533 = vmatpush1.bf16.msra.mxu0 %v1106
    %1534 = vmatprep.subr.bf16.mxu0 %v1111
    %1535 = vmatpush1.bf16.msra.mxu0 %v1110
    %1536 = vmatprep.subr.bf16.mxu0 %v1115
    %1537 = vmatpush1.bf16.msra.mxu0 %v1114
    %1538 = vmatprep.subr.bf16.mxu0 %v1119
    %1539 = vmatpush1.bf16.msra.mxu0 %v1118
    %1540 = vmatprep.subr.bf16.mxu0 %v1123
    %1541 = vmatpush1.bf16.msra.mxu0 %v1122
    %1542 = vmatprep.mubr.bf16.mxu0 %v377
    %1543 = vmatmul.mubr.bf16.gmra.mrb[0].mxu0 %v376
    %v1544 = vpop.f32.mrb[0].mxu0
    %v1545 = vadd.f32 %v348, %v1544
    %v1546 = vpop.f32.mrb[0].mxu0
    %v1547 = vadd.f32 %v352, %v1546
    %v1548 = vpop.f32.mrb[0].mxu0
    %v1549 = vpop.f32.mrb[0].mxu0
    %1550 = vdwg.mxu0
    %1551 = vmatprep.subr.bf16.mxu0 %v1127
    %1552 = vmatpush1.bf16.msra.mxu0 %v1126
    %1553 = vmatprep.subr.bf16.mxu0 %v1131
    %1554 = vmatpush1.bf16.msra.mxu0 %v1130
    %1555 = vmatprep.subr.bf16.mxu0 %v1135
    %1556 = vmatpush1.bf16.msra.mxu0 %v1134
    %1557 = vmatprep.subr.bf16.mxu0 %v1139
    %1558 = vmatpush1.bf16.msra.mxu0 %v1138
    %1559 = vmatprep.subr.bf16.mxu0 %v1143
    %1560 = vmatpush1.bf16.msra.mxu0 %v1142
    %1561 = vmatprep.subr.bf16.mxu0 %v1147
    %1562 = vmatpush1.bf16.msra.mxu0 %v1146
    %1563 = vmatprep.subr.bf16.mxu0 %v1151
    %1564 = vmatpush1.bf16.msra.mxu0 %v1150
    %1565 = vmatprep.subr.bf16.mxu0 %v1155
    %1566 = vmatpush1.bf16.msra.mxu0 %v1154
    %1567 = vmatprep.subr.bf16.mxu0 %v1159
    %1568 = vmatpush1.bf16.msra.mxu0 %v1158
    %1569 = vmatprep.subr.bf16.mxu0 %v1163
    %1570 = vmatpush1.bf16.msra.mxu0 %v1162
    %1571 = vmatprep.subr.bf16.mxu0 %v1167
    %1572 = vmatpush1.bf16.msra.mxu0 %v1166
    %1573 = vmatprep.subr.bf16.mxu0 %v1171
    %1574 = vmatpush1.bf16.msra.mxu0 %v1170
    %1575 = vmatprep.subr.bf16.mxu0 %v1175
    %1576 = vmatpush1.bf16.msra.mxu0 %v1174
    %1577 = vmatprep.subr.bf16.mxu0 %v1179
    %1578 = vmatpush1.bf16.msra.mxu0 %v1178
    %1579 = vmatprep.subr.bf16.mxu0 %v1183
    %1580 = vmatpush1.bf16.msra.mxu0 %v1182
    %1581 = vmatprep.subr.bf16.mxu0 %v1187
    %1582 = vmatpush1.bf16.msra.mxu0 %v1186
    %1583 = vmatprep.mubr.bf16.mxu0 %v379
    %1584 = vmatmul.mubr.bf16.gmra.mrb[0].mxu0 %v378
    %v1585 = vpop.f32.mrb[0].mxu0
    %v1586 = vadd.f32 %v1545, %v1585
    %v1587 = vpop.f32.mrb[0].mxu0
    %v1588 = vadd.f32 %v1547, %v1587
    %v1589 = vpop.f32.mrb[0].mxu0
    %v1590 = vpop.f32.mrb[0].mxu0
    %1591 = vdwg.mxu0
    %1592 = vmatprep.subr.bf16.mxu0 %v1191
    %1593 = vmatpush1.bf16.msra.mxu0 %v1190
    %1594 = vmatprep.subr.bf16.mxu0 %v1195
    %1595 = vmatpush1.bf16.msra.mxu0 %v1194
    %1596 = vmatprep.subr.bf16.mxu0 %v1199
    %1597 = vmatpush1.bf16.msra.mxu0 %v1198
    %1598 = vmatprep.subr.bf16.mxu0 %v1203
    %1599 = vmatpush1.bf16.msra.mxu0 %v1202
    %1600 = vmatprep.subr.bf16.mxu0 %v1207
    %1601 = vmatpush1.bf16.msra.mxu0 %v1206
    %1602 = vmatprep.subr.bf16.mxu0 %v1211
    %1603 = vmatpush1.bf16.msra.mxu0 %v1210
    %1604 = vmatprep.subr.bf16.mxu0 %v1215
    %1605 = vmatpush1.bf16.msra.mxu0 %v1214
    %1606 = vmatprep.subr.bf16.mxu0 %v1219
    %1607 = vmatpush1.bf16.msra.mxu0 %v1218
    %1608 = vmatprep.subr.bf16.mxu0 %v1223
    %1609 = vmatpush1.bf16.msra.mxu0 %v1222
    %1610 = vmatprep.subr.bf16.mxu0 %v1227
    %1611 = vmatpush1.bf16.msra.mxu0 %v1226
    %1612 = vmatprep.subr.bf16.mxu0 %v1231
    %1613 = vmatpush1.bf16.msra.mxu0 %v1230
    %1614 = vmatprep.subr.bf16.mxu0 %v1235
    %1615 = vmatpush1.bf16.msra.mxu0 %v1234
    %1616 = vmatprep.subr.bf16.mxu0 %v1239
    %1617 = vmatpush1.bf16.msra.mxu0 %v1238
    %1618 = vmatprep.subr.bf16.mxu0 %v1243
    %1619 = vmatpush1.bf16.msra.mxu0 %v1242
    %1620 = vmatprep.subr.bf16.mxu0 %v1247
    %1621 = vmatpush1.bf16.msra.mxu0 %v1246
    %1622 = vmatprep.subr.bf16.mxu0 %v1251
    %1623 = vmatpush1.bf16.msra.mxu0 %v1250
    %1624 = vmatprep.mubr.bf16.mxu0 %v381
    %1625 = vmatmul.mubr.bf16.gmra.mrb[0].mxu0 %v380
    %v1626 = vpop.f32.mrb[0].mxu0
    %v1627 = vadd.f32 %v1586, %v1626
    %v1628 = vpop.f32.mrb[0].mxu0
    %v1629 = vadd.f32 %v1588, %v1628
    %v1630 = vpop.f32.mrb[0].mxu0
    %v1631 = vpop.f32.mrb[0].mxu0
    %1632 = vdwg.mxu0
    %1633 = vmatprep.subr.bf16.mxu0 %v1255
    %1634 = vmatpush1.bf16.msra.mxu0 %v1254
    %1635 = vmatprep.subr.bf16.mxu0 %v1259
    %1636 = vmatpush1.bf16.msra.mxu0 %v1258
    %1637 = vmatprep.subr.bf16.mxu0 %v1263
    %1638 = vmatpush1.bf16.msra.mxu0 %v1262
    %1639 = vmatprep.subr.bf16.mxu0 %v1267
    %1640 = vmatpush1.bf16.msra.mxu0 %v1266
    %1641 = vmatprep.subr.bf16.mxu0 %v1271
    %1642 = vmatpush1.bf16.msra.mxu0 %v1270
    %1643 = vmatprep.subr.bf16.mxu0 %v1275
    %1644 = vmatpush1.bf16.msra.mxu0 %v1274
    %1645 = vmatprep.subr.bf16.mxu0 %v1279
    %1646 = vmatpush1.bf16.msra.mxu0 %v1278
    %1647 = vmatprep.subr.bf16.mxu0 %v1283
    %1648 = vmatpush1.bf16.msra.mxu0 %v1282
    %1649 = vmatprep.subr.bf16.mxu0 0
    %1650 = vmatpush1.bf16.msra.mxu0 0
    %1651 = vmatprep.subr.bf16.mxu0 0
    %1652 = vmatpush1.bf16.msra.mxu0 0
    %1653 = vmatprep.subr.bf16.mxu0 0
    %1654 = vmatpush1.bf16.msra.mxu0 0
    %1655 = vmatprep.subr.bf16.mxu0 0
    %1656 = vmatpush1.bf16.msra.mxu0 0
    %1657 = vmatprep.subr.bf16.mxu0 0
    %1658 = vmatpush1.bf16.msra.mxu0 0
    %1659 = vmatprep.subr.bf16.mxu0 0
    %1660 = vmatpush1.bf16.msra.mxu0 0
    %1661 = vmatprep.subr.bf16.mxu0 0
    %1662 = vmatpush1.bf16.msra.mxu0 0
    %1663 = vmatprep.subr.bf16.mxu0 0
    %1664 = vmatpush1.bf16.msra.mxu0 0
    %1665 = vmatprep.mubr.bf16.mxu0 0
    %1666 = vmatmul.mubr.bf16.gmra.mrb[0].mxu0 %v382
    %v1667 = vpop.f32.mrb[0].mxu0
    %v1668 = vadd.f32 %v1627, %v1667
    %v1669 = vpop.f32.mrb[0].mxu0
    %v1670 = vadd.f32 %v1629, %v1669
    %v1671 = vpop.f32.mrb[0].mxu0
    %v1672 = vpop.f32.mrb[0].mxu0
    %1673 = vdwg.mxu0
    %1674 = vmatprep.subr.bf16.mxu0 %v1065
    %1675 = vmatpush1.bf16.msra.mxu0 %v1064
    %1676 = vmatprep.subr.bf16.mxu0 %v1069
    %1677 = vmatpush1.bf16.msra.mxu0 %v1068
    %1678 = vmatprep.subr.bf16.mxu0 %v1073
    %1679 = vmatpush1.bf16.msra.mxu0 %v1072
    %1680 = vmatprep.subr.bf16.mxu0 %v1077
    %1681 = vmatpush1.bf16.msra.mxu0 %v1076
    %1682 = vmatprep.subr.bf16.mxu0 %v1081
    %1683 = vmatpush1.bf16.msra.mxu0 %v1080
    %1684 = vmatprep.subr.bf16.mxu0 %v1085
    %1685 = vmatpush1.bf16.msra.mxu0 %v1084
    %1686 = vmatprep.subr.bf16.mxu0 %v1089
    %1687 = vmatpush1.bf16.msra.mxu0 %v1088
    %1688 = vmatprep.subr.bf16.mxu0 %v1093
    %1689 = vmatpush1.bf16.msra.mxu0 %v1092
    %1690 = vmatprep.subr.bf16.mxu0 %v1097
    %1691 = vmatpush1.bf16.msra.mxu0 %v1096
    %1692 = vmatprep.subr.bf16.mxu0 %v1101
    %1693 = vmatpush1.bf16.msra.mxu0 %v1100
    %1694 = vmatprep.subr.bf16.mxu0 %v1105
    %1695 = vmatpush1.bf16.msra.mxu0 %v1104
    %1696 = vmatprep.subr.bf16.mxu0 %v1109
    %1697 = vmatpush1.bf16.msra.mxu0 %v1108
    %1698 = vmatprep.subr.bf16.mxu0 %v1113
    %1699 = vmatpush1.bf16.msra.mxu0 %v1112
    %1700 = vmatprep.subr.bf16.mxu0 %v1117
    %1701 = vmatpush1.bf16.msra.mxu0 %v1116
    %1702 = vmatprep.subr.bf16.mxu0 %v1121
    %1703 = vmatpush1.bf16.msra.mxu0 %v1120
    %1704 = vmatprep.subr.bf16.mxu0 %v1125
    %1705 = vmatpush1.bf16.msra.mxu0 %v1124
    %1706 = vmatprep.mubr.bf16.mxu0 %v377
    %1707 = vmatmul.mubr.bf16.gmra.mrb[0].mxu0 %v376
    %v1708 = vpop.f32.mrb[0].mxu0
    %v1709 = vadd.f32 %v356, %v1708
    %v1710 = vpop.f32.mrb[0].mxu0
    %v1711 = vadd.f32 %v360, %v1710
    %v1712 = vpop.f32.mrb[0].mxu0
    %v1713 = vpop.f32.mrb[0].mxu0
    %1714 = vdwg.mxu0
    %1715 = vmatprep.subr.bf16.mxu0 %v1129
    %1716 = vmatpush1.bf16.msra.mxu0 %v1128
    %1717 = vmatprep.subr.bf16.mxu0 %v1133
    %1718 = vmatpush1.bf16.msra.mxu0 %v1132
    %1719 = vmatprep.subr.bf16.mxu0 %v1137
    %1720 = vmatpush1.bf16.msra.mxu0 %v1136
    %1721 = vmatprep.subr.bf16.mxu0 %v1141
    %1722 = vmatpush1.bf16.msra.mxu0 %v1140
    %1723 = vmatprep.subr.bf16.mxu0 %v1145
    %1724 = vmatpush1.bf16.msra.mxu0 %v1144
    %1725 = vmatprep.subr.bf16.mxu0 %v1149
    %1726 = vmatpush1.bf16.msra.mxu0 %v1148
    %1727 = vmatprep.subr.bf16.mxu0 %v1153
    %1728 = vmatpush1.bf16.msra.mxu0 %v1152
    %1729 = vmatprep.subr.bf16.mxu0 %v1157
    %1730 = vmatpush1.bf16.msra.mxu0 %v1156
    %1731 = vmatprep.subr.bf16.mxu0 %v1161
    %1732 = vmatpush1.bf16.msra.mxu0 %v1160
    %1733 = vmatprep.subr.bf16.mxu0 %v1165
    %1734 = vmatpush1.bf16.msra.mxu0 %v1164
    %1735 = vmatprep.subr.bf16.mxu0 %v1169
    %1736 = vmatpush1.bf16.msra.mxu0 %v1168
    %1737 = vmatprep.subr.bf16.mxu0 %v1173
    %1738 = vmatpush1.bf16.msra.mxu0 %v1172
    %1739 = vmatprep.subr.bf16.mxu0 %v1177
    %1740 = vmatpush1.bf16.msra.mxu0 %v1176
    %1741 = vmatprep.subr.bf16.mxu0 %v1181
    %1742 = vmatpush1.bf16.msra.mxu0 %v1180
    %1743 = vmatprep.subr.bf16.mxu0 %v1185
    %1744 = vmatpush1.bf16.msra.mxu0 %v1184
    %1745 = vmatprep.subr.bf16.mxu0 %v1189
    %1746 = vmatpush1.bf16.msra.mxu0 %v1188
    %1747 = vmatprep.mubr.bf16.mxu0 %v379
    %1748 = vmatmul.mubr.bf16.gmra.mrb[0].mxu0 %v378
    %v1749 = vpop.f32.mrb[0].mxu0
    %v1750 = vadd.f32 %v1709, %v1749
    %v1751 = vpop.f32.mrb[0].mxu0
    %v1752 = vadd.f32 %v1711, %v1751
    %v1753 = vpop.f32.mrb[0].mxu0
    %v1754 = vpop.f32.mrb[0].mxu0
    %1755 = vdwg.mxu0
    %1756 = vmatprep.subr.bf16.mxu0 %v1193
    %1757 = vmatpush1.bf16.msra.mxu0 %v1192
    %1758 = vmatprep.subr.bf16.mxu0 %v1197
    %1759 = vmatpush1.bf16.msra.mxu0 %v1196
    %1760 = vmatprep.subr.bf16.mxu0 %v1201
    %1761 = vmatpush1.bf16.msra.mxu0 %v1200
    %1762 = vmatprep.subr.bf16.mxu0 %v1205
    %1763 = vmatpush1.bf16.msra.mxu0 %v1204
    %1764 = vmatprep.subr.bf16.mxu0 %v1209
    %1765 = vmatpush1.bf16.msra.mxu0 %v1208
    %1766 = vmatprep.subr.bf16.mxu0 %v1213
    %1767 = vmatpush1.bf16.msra.mxu0 %v1212
    %1768 = vmatprep.subr.bf16.mxu0 %v1217
    %1769 = vmatpush1.bf16.msra.mxu0 %v1216
    %1770 = vmatprep.subr.bf16.mxu0 %v1221
    %1771 = vmatpush1.bf16.msra.mxu0 %v1220
    %1772 = vmatprep.subr.bf16.mxu0 %v1225
    %1773 = vmatpush1.bf16.msra.mxu0 %v1224
    %1774 = vmatprep.subr.bf16.mxu0 %v1229
    %1775 = vmatpush1.bf16.msra.mxu0 %v1228
    %1776 = vmatprep.subr.bf16.mxu0 %v1233
    %1777 = vmatpush1.bf16.msra.mxu0 %v1232
    %1778 = vmatprep.subr.bf16.mxu0 %v1237
    %1779 = vmatpush1.bf16.msra.mxu0 %v1236
    %1780 = vmatprep.subr.bf16.mxu0 %v1241
    %1781 = vmatpush1.bf16.msra.mxu0 %v1240
    %1782 = vmatprep.subr.bf16.mxu0 %v1245
    %1783 = vmatpush1.bf16.msra.mxu0 %v1244
    %1784 = vmatprep.subr.bf16.mxu0 %v1249
    %1785 = vmatpush1.bf16.msra.mxu0 %v1248
    %1786 = vmatprep.subr.bf16.mxu0 %v1253
    %1787 = vmatpush1.bf16.msra.mxu0 %v1252
    %1788 = vmatprep.mubr.bf16.mxu0 %v381
    %1789 = vmatmul.mubr.bf16.gmra.mrb[0].mxu0 %v380
    %v1790 = vpop.f32.mrb[0].mxu0
    %v1791 = vadd.f32 %v1750, %v1790
    %v1792 = vpop.f32.mrb[0].mxu0
    %v1793 = vadd.f32 %v1752, %v1792
    %v1794 = vpop.f32.mrb[0].mxu0
    %v1795 = vpop.f32.mrb[0].mxu0
    %1796 = vdwg.mxu0
    %1797 = vmatprep.subr.bf16.mxu0 %v1257
    %1798 = vmatpush1.bf16.msra.mxu0 %v1256
    %1799 = vmatprep.subr.bf16.mxu0 %v1261
    %1800 = vmatpush1.bf16.msra.mxu0 %v1260
    %1801 = vmatprep.subr.bf16.mxu0 %v1265
    %1802 = vmatpush1.bf16.msra.mxu0 %v1264
    %1803 = vmatprep.subr.bf16.mxu0 %v1269
    %1804 = vmatpush1.bf16.msra.mxu0 %v1268
    %1805 = vmatprep.subr.bf16.mxu0 %v1273
    %1806 = vmatpush1.bf16.msra.mxu0 %v1272
    %1807 = vmatprep.subr.bf16.mxu0 %v1277
    %1808 = vmatpush1.bf16.msra.mxu0 %v1276
    %1809 = vmatprep.subr.bf16.mxu0 %v1281
    %1810 = vmatpush1.bf16.msra.mxu0 %v1280
    %1811 = vmatprep.subr.bf16.mxu0 %v1285
    %1812 = vmatpush1.bf16.msra.mxu0 %v1284
    %1813 = vmatprep.subr.bf16.mxu0 0
    %1814 = vmatpush1.bf16.msra.mxu0 0
    %1815 = vmatprep.subr.bf16.mxu0 0
    %1816 = vmatpush1.bf16.msra.mxu0 0
    %1817 = vmatprep.subr.bf16.mxu0 0
    %1818 = vmatpush1.bf16.msra.mxu0 0
    %1819 = vmatprep.subr.bf16.mxu0 0
    %1820 = vmatpush1.bf16.msra.mxu0 0
    %1821 = vmatprep.subr.bf16.mxu0 0
    %1822 = vmatpush1.bf16.msra.mxu0 0
    %1823 = vmatprep.subr.bf16.mxu0 0
    %1824 = vmatpush1.bf16.msra.mxu0 0
    %1825 = vmatprep.subr.bf16.mxu0 0
    %1826 = vmatpush1.bf16.msra.mxu0 0
    %1827 = vmatprep.subr.bf16.mxu0 0
    %1828 = vmatpush1.bf16.msra.mxu0 0
    %1829 = vmatprep.mubr.bf16.mxu0 0
    %1830 = vmatmul.mubr.bf16.gmra.mrb[0].mxu0 %v382
    %v1831 = vpop.f32.mrb[0].mxu0
    %v1832 = vadd.f32 %v1791, %v1831
    %v1833 = vpop.f32.mrb[0].mxu0
    %v1834 = vadd.f32 %v1793, %v1833
    %v1835 = vpop.f32.mrb[0].mxu0
    %v1836 = vpop.f32.mrb[0].mxu0
    %1837 = vdwg.mxu0
    %v1838 = vmax.f32 %v1668, 0.0
    %v1839 = vmax.f32 %v1670, 0.0
    %v1840 = vmax.f32 %v1832, 0.0
    %v1841 = vmax.f32 %v1834, 0.0
    %v1842 = vpack.c.bf16 %v1838, %v1838
    %v1843 = vpack.c.bf16 %v1839, %v1839
    %v1844 = vpack.c.bf16 %v1840, %v1840
    %v1845 = vpack.c.bf16 %v1841, %v1841
    %v1846 = vld [vmem:[#allocation8] sm:$0xff]
    %v1847 = vld [vmem:[#allocation8 + $0x8] sm:$0xff]
    %v1848 = vld [vmem:[#allocation8 + $0x10] sm:$0xff]
    %v1849 = vld [vmem:[#allocation8 + $0x18] sm:$0xff]
    %v1850 = vld [vmem:[#allocation8 + $0x20] sm:$0xff]
    %v1851 = vld [vmem:[#allocation8 + $0x28] sm:$0xff]
    %v1852 = vld [vmem:[#allocation8 + $0x30] sm:$0xff]
    %v1853 = vld [vmem:[#allocation8 + $0x38] sm:$0xff]
    %v1854 = vld [vmem:[#allocation8 + $0x40] sm:$0xff]
    %v1855 = vld [vmem:[#allocation8 + $0x48] sm:$0xff]
    %v1856 = vld [vmem:[#allocation8 + $0x50] sm:$0xff]
    %v1857 = vld [vmem:[#allocation8 + $0x58] sm:$0xff]
    %v1858 = vld [vmem:[#allocation8 + $0x60] sm:$0xff]
    %v1859 = vld [vmem:[#allocation8 + $0x68] sm:$0xff]
    %v1860 = vld [vmem:[#allocation8 + $0x70] sm:$0xff]
    %v1861 = vld [vmem:[#allocation8 + $0x78] sm:$0xff]
    %v1862 = vld [vmem:[#allocation8 + $0x80] sm:$0xff]
    %v1863 = vld [vmem:[#allocation8 + $0x88] sm:$0xff]
    %v1864 = vld [vmem:[#allocation8 + $0x90] sm:$0xff]
    %v1865 = vld [vmem:[#allocation8 + $0x98] sm:$0xff]
    %v1866 = vld [vmem:[#allocation8 + $0xa0] sm:$0xff]
    %v1867 = vld [vmem:[#allocation8 + $0xa8] sm:$0xff]
    %v1868 = vld [vmem:[#allocation8 + $0xb0] sm:$0xff]
    %v1869 = vld [vmem:[#allocation8 + $0xb8] sm:$0xff]
    %v1870 = vld [vmem:[#allocation8 + $0xc0] sm:$0xff]
    %v1871 = vld [vmem:[#allocation8 + $0xc8] sm:$0xff]
    %v1872 = vld [vmem:[#allocation8 + $0xd0] sm:$0xff]
    %v1873 = vld [vmem:[#allocation8 + $0xd8] sm:$0xff]
    %v1874 = vld [vmem:[#allocation8 + $0xe0] sm:$0xff]
    %v1875 = vld [vmem:[#allocation8 + $0xe8] sm:$0xff]
    %v1876 = vld [vmem:[#allocation8 + $0xf0] sm:$0xff]
    %v1877 = vld [vmem:[#allocation8 + $0xf8] sm:$0xff]
    %v1878 = vld [vmem:[#allocation8 + $0x100] sm:$0xff]
    %v1879 = vld [vmem:[#allocation8 + $0x108] sm:$0xff]
    %v1880 = vld [vmem:[#allocation8 + $0x110] sm:$0xff]
    %v1881 = vld [vmem:[#allocation8 + $0x118] sm:$0xff]
    %v1882 = vld [vmem:[#allocation8 + $0x120] sm:$0xff]
    %v1883 = vld [vmem:[#allocation8 + $0x128] sm:$0xff]
    %v1884 = vld [vmem:[#allocation8 + $0x130] sm:$0xff]
    %v1885 = vld [vmem:[#allocation8 + $0x138] sm:$0xff]
    %v1886 = vld [vmem:[#allocation8 + $0x140] sm:$0xff]
    %v1887 = vld [vmem:[#allocation8 + $0x148] sm:$0xff]
    %v1888 = vld [vmem:[#allocation8 + $0x150] sm:$0xff]
    %v1889 = vld [vmem:[#allocation8 + $0x158] sm:$0xff]
    %v1890 = vld [vmem:[#allocation8 + $0x160] sm:$0xff]
    %v1891 = vld [vmem:[#allocation8 + $0x168] sm:$0xff]
    %v1892 = vld [vmem:[#allocation8 + $0x170] sm:$0xff]
    %v1893 = vld [vmem:[#allocation8 + $0x178] sm:$0xff]
    %v1894 = vld [vmem:[#allocation8 + $0x180] sm:$0xff]
    %v1895 = vld [vmem:[#allocation8 + $0x188] sm:$0xff]
    %v1896 = vld [vmem:[#allocation8 + $0x190] sm:$0xff]
    %v1897 = vld [vmem:[#allocation8 + $0x198] sm:$0xff]
    %v1898 = vld [vmem:[#allocation8 + $0x1a0] sm:$0xff]
    %v1899 = vld [vmem:[#allocation8 + $0x1a8] sm:$0xff]
    %v1900 = vld [vmem:[#allocation8 + $0x1b0] sm:$0xff]
    %v1901 = vld [vmem:[#allocation8 + $0x1b8] sm:$0xff]
    %v1902 = vld [vmem:[#allocation8 + $0x1c0] sm:$0xff]
    %v1903 = vld [vmem:[#allocation8 + $0x1c8] sm:$0xff]
    %v1904 = vld [vmem:[#allocation8 + $0x1d0] sm:$0xff]
    %v1905 = vld [vmem:[#allocation8 + $0x1d8] sm:$0xff]
    %v1906 = vld [vmem:[#allocation8 + $0x1e0] sm:$0xff]
    %v1907 = vld [vmem:[#allocation8 + $0x1e8] sm:$0xff]
    %v1908 = vld [vmem:[#allocation8 + $0x1f0] sm:$0xff]
    %v1909 = vld [vmem:[#allocation8 + $0x1f8] sm:$0xff]
    %v1910 = vld [vmem:[#allocation8 + $0x200] sm:$0xff]
    %v1911 = vld [vmem:[#allocation8 + $0x208] sm:$0xff]
    %v1912 = vld [vmem:[#allocation8 + $0x210] sm:$0xff]
    %v1913 = vld [vmem:[#allocation8 + $0x218] sm:$0xff]
    %v1914 = vld [vmem:[#allocation8 + $0x220] sm:$0xff]
    %v1915 = vld [vmem:[#allocation8 + $0x228] sm:$0xff]
    %v1916 = vld [vmem:[#allocation8 + $0x230] sm:$0xff]
    %v1917 = vld [vmem:[#allocation8 + $0x238] sm:$0xff]
    %v1918 = vld [vmem:[#allocation8 + $0x240] sm:$0xff]
    %v1919 = vld [vmem:[#allocation8 + $0x248] sm:$0xff]
    %v1920 = vld [vmem:[#allocation8 + $0x250] sm:$0xff]
    %v1921 = vld [vmem:[#allocation8 + $0x258] sm:$0xff]
    %v1922 = vld [vmem:[#allocation8 + $0x260] sm:$0xff]
    %v1923 = vld [vmem:[#allocation8 + $0x268] sm:$0xff]
    %v1924 = vld [vmem:[#allocation8 + $0x270] sm:$0xff]
    %v1925 = vld [vmem:[#allocation8 + $0x278] sm:$0xff]
    %v1926 = vld [vmem:[#allocation8 + $0x280] sm:$0xff]
    %v1927 = vld [vmem:[#allocation8 + $0x288] sm:$0xff]
    %v1928 = vld [vmem:[#allocation8 + $0x290] sm:$0xff]
    %v1929 = vld [vmem:[#allocation8 + $0x298] sm:$0xff]
    %v1930 = vld [vmem:[#allocation8 + $0x2a0] sm:$0xff]
    %v1931 = vld [vmem:[#allocation8 + $0x2a8] sm:$0xff]
    %v1932 = vld [vmem:[#allocation8 + $0x2b0] sm:$0xff]
    %v1933 = vld [vmem:[#allocation8 + $0x2b8] sm:$0xff]
    %v1934 = vld [vmem:[#allocation8 + $0x2c0] sm:$0xff]
    %v1935 = vld [vmem:[#allocation8 + $0x2c8] sm:$0xff]
    %v1936 = vld [vmem:[#allocation8 + $0x2d0] sm:$0xff]
    %v1937 = vld [vmem:[#allocation8 + $0x2d8] sm:$0xff]
    %v1938 = vld [vmem:[#allocation8 + $0x2e0] sm:$0xff]
    %v1939 = vld [vmem:[#allocation8 + $0x2e8] sm:$0xff]
    %v1940 = vld [vmem:[#allocation8 + $0x2f0] sm:$0xff]
    %v1941 = vld [vmem:[#allocation8 + $0x2f8] sm:$0xff]
    %v1942 = vld [vmem:[#allocation8 + $0x300] sm:$0xff]
    %v1943 = vld [vmem:[#allocation8 + $0x308] sm:$0xff]
    %v1944 = vld [vmem:[#allocation8 + $0x310] sm:$0xff]
    %v1945 = vld [vmem:[#allocation8 + $0x318] sm:$0xff]
    %v1946 = vld [vmem:[#allocation8 + $0x320] sm:$0xff]
    %v1947 = vld [vmem:[#allocation8 + $0x328] sm:$0xff]
    %v1948 = vld [vmem:[#allocation8 + $0x330] sm:$0xff]
    %v1949 = vld [vmem:[#allocation8 + $0x338] sm:$0xff]
    %v1950 = vld [vmem:[#allocation8 + $0x340] sm:$0xff]
    %v1951 = vld [vmem:[#allocation8 + $0x348] sm:$0xff]
    %v1952 = vld [vmem:[#allocation8 + $0x350] sm:$0xff]
    %v1953 = vld [vmem:[#allocation8 + $0x358] sm:$0xff]
    %v1954 = vld [vmem:[#allocation8 + $0x360] sm:$0xff]
    %v1955 = vld [vmem:[#allocation8 + $0x368] sm:$0xff]
    %v1956 = vld [vmem:[#allocation8 + $0x370] sm:$0xff]
    %v1957 = vld [vmem:[#allocation8 + $0x378] sm:$0xff]
    %v1958 = vld [vmem:[#allocation8 + $0x380] sm:$0xff]
    %v1959 = vld [vmem:[#allocation8 + $0x388] sm:$0xff]
    %v1960 = vld [vmem:[#allocation8 + $0x390] sm:$0xff]
    %v1961 = vld [vmem:[#allocation8 + $0x398] sm:$0xff]
    %v1962 = vld [vmem:[#allocation8 + $0x3a0] sm:$0xff]
    %v1963 = vld [vmem:[#allocation8 + $0x3a8] sm:$0xff]
    %v1964 = vld [vmem:[#allocation8 + $0x3b0] sm:$0xff]
    %v1965 = vld [vmem:[#allocation8 + $0x3b8] sm:$0xff]
    %v1966 = vld [vmem:[#allocation8 + $0x3c0] sm:$0xff]
    %v1967 = vld [vmem:[#allocation8 + $0x3c8] sm:$0xff]
    %v1968 = vld [vmem:[#allocation8 + $0x3d0] sm:$0xff]
    %v1969 = vld [vmem:[#allocation8 + $0x3d8] sm:$0xff]
    %v1970 = vld [vmem:[#allocation8 + $0x3e0] sm:$0xff]
    %v1971 = vld [vmem:[#allocation8 + $0x3e8] sm:$0xff]
    %v1972 = vld [vmem:[#allocation8 + $0x3f0] sm:$0xff]
    %v1973 = vld [vmem:[#allocation8 + $0x3f8] sm:$0xff]
    %v1974 = vld [vmem:[#allocation10] sm:$0xf]
    %v1976 = vlaneseq
    %v1977 = vshrl.u32 %v1976, 7
    %v1978 = vsub.s32 0, %v1977
    %v1979 = vrot.slane %v1974, %v1978
    %v1980 = vlaneseq
    %v1981 = vshrl.u32 %v1980, 7
    %v1982 = vsub.s32 1, %v1981
    %v1983 = vrot.slane %v1974, %v1982
    %v1984 = vlaneseq
    %v1985 = vshrl.u32 %v1984, 7
    %v1986 = vsub.s32 2, %v1985
    %v1987 = vrot.slane %v1974, %v1986
    %v1988 = vlaneseq
    %v1989 = vshrl.u32 %v1988, 7
    %v1990 = vsub.s32 3, %v1989
    %v1991 = vrot.slane %v1974, %v1990
    %v2124 = vunpack.c.l.b16 %v1846
    %v2125 = vunpack.c.h.b16 %v1846
    %v2126 = vunpack.c.l.b16 %v1847
    %v2127 = vunpack.c.h.b16 %v1847
    %v2128 = vunpack.c.l.b16 %v1848
    %v2129 = vunpack.c.h.b16 %v1848
    %v2130 = vunpack.c.l.b16 %v1849
    %v2131 = vunpack.c.h.b16 %v1849
    %v2132 = vunpack.c.l.b16 %v1850
    %v2133 = vunpack.c.h.b16 %v1850
    %v2134 = vunpack.c.l.b16 %v1851
    %v2135 = vunpack.c.h.b16 %v1851
    %v2136 = vunpack.c.l.b16 %v1852
    %v2137 = vunpack.c.h.b16 %v1852
    %v2138 = vunpack.c.l.b16 %v1853
    %v2139 = vunpack.c.h.b16 %v1853
    %v2140 = vunpack.c.l.b16 %v1854
    %v2141 = vunpack.c.h.b16 %v1854
    %v2142 = vunpack.c.l.b16 %v1855
    %v2143 = vunpack.c.h.b16 %v1855
    %v2144 = vunpack.c.l.b16 %v1856
    %v2145 = vunpack.c.h.b16 %v1856
    %v2146 = vunpack.c.l.b16 %v1857
    %v2147 = vunpack.c.h.b16 %v1857
    %v2148 = vunpack.c.l.b16 %v1858
    %v2149 = vunpack.c.h.b16 %v1858
    %v2150 = vunpack.c.l.b16 %v1859
    %v2151 = vunpack.c.h.b16 %v1859
    %v2152 = vunpack.c.l.b16 %v1860
    %v2153 = vunpack.c.h.b16 %v1860
    %v2154 = vunpack.c.l.b16 %v1861
    %v2155 = vunpack.c.h.b16 %v1861
    %v2156 = vunpack.c.l.b16 %v1862
    %v2157 = vunpack.c.h.b16 %v1862
    %v2158 = vunpack.c.l.b16 %v1863
    %v2159 = vunpack.c.h.b16 %v1863
    %v2160 = vunpack.c.l.b16 %v1864
    %v2161 = vunpack.c.h.b16 %v1864
    %v2162 = vunpack.c.l.b16 %v1865
    %v2163 = vunpack.c.h.b16 %v1865
    %v2164 = vunpack.c.l.b16 %v1866
    %v2165 = vunpack.c.h.b16 %v1866
    %v2166 = vunpack.c.l.b16 %v1867
    %v2167 = vunpack.c.h.b16 %v1867
    %v2168 = vunpack.c.l.b16 %v1868
    %v2169 = vunpack.c.h.b16 %v1868
    %v2170 = vunpack.c.l.b16 %v1869
    %v2171 = vunpack.c.h.b16 %v1869
    %v2172 = vunpack.c.l.b16 %v1870
    %v2173 = vunpack.c.h.b16 %v1870
    %v2174 = vunpack.c.l.b16 %v1871
    %v2175 = vunpack.c.h.b16 %v1871
    %v2176 = vunpack.c.l.b16 %v1872
    %v2177 = vunpack.c.h.b16 %v1872
    %v2178 = vunpack.c.l.b16 %v1873
    %v2179 = vunpack.c.h.b16 %v1873
    %v2180 = vunpack.c.l.b16 %v1874
    %v2181 = vunpack.c.h.b16 %v1874
    %v2182 = vunpack.c.l.b16 %v1875
    %v2183 = vunpack.c.h.b16 %v1875
    %v2184 = vunpack.c.l.b16 %v1876
    %v2185 = vunpack.c.h.b16 %v1876
    %v2186 = vunpack.c.l.b16 %v1877
    %v2187 = vunpack.c.h.b16 %v1877
    %v2188 = vunpack.c.l.b16 %v1878
    %v2189 = vunpack.c.h.b16 %v1878
    %v2190 = vunpack.c.l.b16 %v1879
    %v2191 = vunpack.c.h.b16 %v1879
    %v2192 = vunpack.c.l.b16 %v1880
    %v2193 = vunpack.c.h.b16 %v1880
    %v2194 = vunpack.c.l.b16 %v1881
    %v2195 = vunpack.c.h.b16 %v1881
    %v2196 = vunpack.c.l.b16 %v1882
    %v2197 = vunpack.c.h.b16 %v1882
    %v2198 = vunpack.c.l.b16 %v1883
    %v2199 = vunpack.c.h.b16 %v1883
    %v2200 = vunpack.c.l.b16 %v1884
    %v2201 = vunpack.c.h.b16 %v1884
    %v2202 = vunpack.c.l.b16 %v1885
    %v2203 = vunpack.c.h.b16 %v1885
    %v2204 = vunpack.c.l.b16 %v1886
    %v2205 = vunpack.c.h.b16 %v1886
    %v2206 = vunpack.c.l.b16 %v1887
    %v2207 = vunpack.c.h.b16 %v1887
    %v2208 = vunpack.c.l.b16 %v1888
    %v2209 = vunpack.c.h.b16 %v1888
    %v2210 = vunpack.c.l.b16 %v1889
    %v2211 = vunpack.c.h.b16 %v1889
    %v2212 = vunpack.c.l.b16 %v1890
    %v2213 = vunpack.c.h.b16 %v1890
    %v2214 = vunpack.c.l.b16 %v1891
    %v2215 = vunpack.c.h.b16 %v1891
    %v2216 = vunpack.c.l.b16 %v1892
    %v2217 = vunpack.c.h.b16 %v1892
    %v2218 = vunpack.c.l.b16 %v1893
    %v2219 = vunpack.c.h.b16 %v1893
    %v2220 = vunpack.c.l.b16 %v1894
    %v2221 = vunpack.c.h.b16 %v1894
    %v2222 = vunpack.c.l.b16 %v1895
    %v2223 = vunpack.c.h.b16 %v1895
    %v2224 = vunpack.c.l.b16 %v1896
    %v2225 = vunpack.c.h.b16 %v1896
    %v2226 = vunpack.c.l.b16 %v1897
    %v2227 = vunpack.c.h.b16 %v1897
    %v2228 = vunpack.c.l.b16 %v1898
    %v2229 = vunpack.c.h.b16 %v1898
    %v2230 = vunpack.c.l.b16 %v1899
    %v2231 = vunpack.c.h.b16 %v1899
    %v2232 = vunpack.c.l.b16 %v1900
    %v2233 = vunpack.c.h.b16 %v1900
    %v2234 = vunpack.c.l.b16 %v1901
    %v2235 = vunpack.c.h.b16 %v1901
    %v2236 = vunpack.c.l.b16 %v1902
    %v2237 = vunpack.c.h.b16 %v1902
    %v2238 = vunpack.c.l.b16 %v1903
    %v2239 = vunpack.c.h.b16 %v1903
    %v2240 = vunpack.c.l.b16 %v1904
    %v2241 = vunpack.c.h.b16 %v1904
    %v2242 = vunpack.c.l.b16 %v1905
    %v2243 = vunpack.c.h.b16 %v1905
    %v2244 = vunpack.c.l.b16 %v1906
    %v2245 = vunpack.c.h.b16 %v1906
    %v2246 = vunpack.c.l.b16 %v1907
    %v2247 = vunpack.c.h.b16 %v1907
    %v2248 = vunpack.c.l.b16 %v1908
    %v2249 = vunpack.c.h.b16 %v1908
    %v2250 = vunpack.c.l.b16 %v1909
    %v2251 = vunpack.c.h.b16 %v1909
    %v2252 = vunpack.c.l.b16 %v1910
    %v2253 = vunpack.c.h.b16 %v1910
    %v2254 = vunpack.c.l.b16 %v1911
    %v2255 = vunpack.c.h.b16 %v1911
    %v2256 = vunpack.c.l.b16 %v1912
    %v2257 = vunpack.c.h.b16 %v1912
    %v2258 = vunpack.c.l.b16 %v1913
    %v2259 = vunpack.c.h.b16 %v1913
    %v2260 = vunpack.c.l.b16 %v1914
    %v2261 = vunpack.c.h.b16 %v1914
    %v2262 = vunpack.c.l.b16 %v1915
    %v2263 = vunpack.c.h.b16 %v1915
    %v2264 = vunpack.c.l.b16 %v1916
    %v2265 = vunpack.c.h.b16 %v1916
    %v2266 = vunpack.c.l.b16 %v1917
    %v2267 = vunpack.c.h.b16 %v1917
    %v2268 = vunpack.c.l.b16 %v1918
    %v2269 = vunpack.c.h.b16 %v1918
    %v2270 = vunpack.c.l.b16 %v1919
    %v2271 = vunpack.c.h.b16 %v1919
    %v2272 = vunpack.c.l.b16 %v1920
    %v2273 = vunpack.c.h.b16 %v1920
    %v2274 = vunpack.c.l.b16 %v1921
    %v2275 = vunpack.c.h.b16 %v1921
    %v2276 = vunpack.c.l.b16 %v1922
    %v2277 = vunpack.c.h.b16 %v1922
    %v2278 = vunpack.c.l.b16 %v1923
    %v2279 = vunpack.c.h.b16 %v1923
    %v2280 = vunpack.c.l.b16 %v1924
    %v2281 = vunpack.c.h.b16 %v1924
    %v2282 = vunpack.c.l.b16 %v1925
    %v2283 = vunpack.c.h.b16 %v1925
    %v2284 = vunpack.c.l.b16 %v1926
    %v2285 = vunpack.c.h.b16 %v1926
    %v2286 = vunpack.c.l.b16 %v1927
    %v2287 = vunpack.c.h.b16 %v1927
    %v2288 = vunpack.c.l.b16 %v1928
    %v2289 = vunpack.c.h.b16 %v1928
    %v2290 = vunpack.c.l.b16 %v1929
    %v2291 = vunpack.c.h.b16 %v1929
    %v2292 = vunpack.c.l.b16 %v1930
    %v2293 = vunpack.c.h.b16 %v1930
    %v2294 = vunpack.c.l.b16 %v1931
    %v2295 = vunpack.c.h.b16 %v1931
    %v2296 = vunpack.c.l.b16 %v1932
    %v2297 = vunpack.c.h.b16 %v1932
    %v2298 = vunpack.c.l.b16 %v1933
    %v2299 = vunpack.c.h.b16 %v1933
    %v2300 = vunpack.c.l.b16 %v1934
    %v2301 = vunpack.c.h.b16 %v1934
    %v2302 = vunpack.c.l.b16 %v1935
    %v2303 = vunpack.c.h.b16 %v1935
    %v2304 = vunpack.c.l.b16 %v1936
    %v2305 = vunpack.c.h.b16 %v1936
    %v2306 = vunpack.c.l.b16 %v1937
    %v2307 = vunpack.c.h.b16 %v1937
    %v2308 = vunpack.c.l.b16 %v1938
    %v2309 = vunpack.c.h.b16 %v1938
    %v2310 = vunpack.c.l.b16 %v1939
    %v2311 = vunpack.c.h.b16 %v1939
    %v2312 = vunpack.c.l.b16 %v1940
    %v2313 = vunpack.c.h.b16 %v1940
    %v2314 = vunpack.c.l.b16 %v1941
    %v2315 = vunpack.c.h.b16 %v1941
    %v2316 = vunpack.c.l.b16 %v1942
    %v2317 = vunpack.c.h.b16 %v1942
    %v2318 = vunpack.c.l.b16 %v1943
    %v2319 = vunpack.c.h.b16 %v1943
    %v2320 = vunpack.c.l.b16 %v1944
    %v2321 = vunpack.c.h.b16 %v1944
    %v2322 = vunpack.c.l.b16 %v1945
    %v2323 = vunpack.c.h.b16 %v1945
    %v2324 = vunpack.c.l.b16 %v1946
    %v2325 = vunpack.c.h.b16 %v1946
    %v2326 = vunpack.c.l.b16 %v1947
    %v2327 = vunpack.c.h.b16 %v1947
    %v2328 = vunpack.c.l.b16 %v1948
    %v2329 = vunpack.c.h.b16 %v1948
    %v2330 = vunpack.c.l.b16 %v1949
    %v2331 = vunpack.c.h.b16 %v1949
    %v2332 = vunpack.c.l.b16 %v1950
    %v2333 = vunpack.c.h.b16 %v1950
    %v2334 = vunpack.c.l.b16 %v1951
    %v2335 = vunpack.c.h.b16 %v1951
    %v2336 = vunpack.c.l.b16 %v1952
    %v2337 = vunpack.c.h.b16 %v1952
    %v2338 = vunpack.c.l.b16 %v1953
    %v2339 = vunpack.c.h.b16 %v1953
    %v2340 = vunpack.c.l.b16 %v1954
    %v2341 = vunpack.c.h.b16 %v1954
    %v2342 = vunpack.c.l.b16 %v1955
    %v2343 = vunpack.c.h.b16 %v1955
    %v2344 = vunpack.c.l.b16 %v1956
    %v2345 = vunpack.c.h.b16 %v1956
    %v2346 = vunpack.c.l.b16 %v1957
    %v2347 = vunpack.c.h.b16 %v1957
    %v2348 = vunpack.c.l.b16 %v1958
    %v2349 = vunpack.c.h.b16 %v1958
    %v2350 = vunpack.c.l.b16 %v1959
    %v2351 = vunpack.c.h.b16 %v1959
    %v2352 = vunpack.c.l.b16 %v1960
    %v2353 = vunpack.c.h.b16 %v1960
    %v2354 = vunpack.c.l.b16 %v1961
    %v2355 = vunpack.c.h.b16 %v1961
    %v2356 = vunpack.c.l.b16 %v1962
    %v2357 = vunpack.c.h.b16 %v1962
    %v2358 = vunpack.c.l.b16 %v1963
    %v2359 = vunpack.c.h.b16 %v1963
    %v2360 = vunpack.c.l.b16 %v1964
    %v2361 = vunpack.c.h.b16 %v1964
    %v2362 = vunpack.c.l.b16 %v1965
    %v2363 = vunpack.c.h.b16 %v1965
    %v2364 = vunpack.c.l.b16 %v1966
    %v2365 = vunpack.c.h.b16 %v1966
    %v2366 = vunpack.c.l.b16 %v1967
    %v2367 = vunpack.c.h.b16 %v1967
    %v2368 = vunpack.c.l.b16 %v1968
    %v2369 = vunpack.c.h.b16 %v1968
    %v2370 = vunpack.c.l.b16 %v1969
    %v2371 = vunpack.c.h.b16 %v1969
    %v2372 = vunpack.c.l.b16 %v1970
    %v2373 = vunpack.c.h.b16 %v1970
    %v2374 = vunpack.c.l.b16 %v1971
    %v2375 = vunpack.c.h.b16 %v1971
    %v2376 = vunpack.c.l.b16 %v1972
    %v2377 = vunpack.c.h.b16 %v1972
    %v2378 = vunpack.c.l.b16 %v1973
    %v2379 = vunpack.c.h.b16 %v1973
    %v2380 = vpack.c.b16 %v2128, %v2124
    %v2381 = vpack.c.b16 %v2129, %v2125
    %v2382 = vpack.c.b16 %v2130, %v2126
    %v2383 = vpack.c.b16 %v2131, %v2127
    %v2384 = vpack.c.b16 %v2136, %v2132
    %v2385 = vpack.c.b16 %v2137, %v2133
    %v2386 = vpack.c.b16 %v2138, %v2134
    %v2387 = vpack.c.b16 %v2139, %v2135
    %v2388 = vpack.c.b16 %v2144, %v2140
    %v2389 = vpack.c.b16 %v2145, %v2141
    %v2390 = vpack.c.b16 %v2146, %v2142
    %v2391 = vpack.c.b16 %v2147, %v2143
    %v2392 = vpack.c.b16 %v2152, %v2148
    %v2393 = vpack.c.b16 %v2153, %v2149
    %v2394 = vpack.c.b16 %v2154, %v2150
    %v2395 = vpack.c.b16 %v2155, %v2151
    %v2396 = vpack.c.b16 %v2160, %v2156
    %v2397 = vpack.c.b16 %v2161, %v2157
    %v2398 = vpack.c.b16 %v2162, %v2158
    %v2399 = vpack.c.b16 %v2163, %v2159
    %v2400 = vpack.c.b16 %v2168, %v2164
    %v2401 = vpack.c.b16 %v2169, %v2165
    %v2402 = vpack.c.b16 %v2170, %v2166
    %v2403 = vpack.c.b16 %v2171, %v2167
    %v2404 = vpack.c.b16 %v2176, %v2172
    %v2405 = vpack.c.b16 %v2177, %v2173
    %v2406 = vpack.c.b16 %v2178, %v2174
    %v2407 = vpack.c.b16 %v2179, %v2175
    %v2408 = vpack.c.b16 %v2184, %v2180
    %v2409 = vpack.c.b16 %v2185, %v2181
    %v2410 = vpack.c.b16 %v2186, %v2182
    %v2411 = vpack.c.b16 %v2187, %v2183
    %v2412 = vpack.c.b16 %v2192, %v2188
    %v2413 = vpack.c.b16 %v2193, %v2189
    %v2414 = vpack.c.b16 %v2194, %v2190
    %v2415 = vpack.c.b16 %v2195, %v2191
    %v2416 = vpack.c.b16 %v2200, %v2196
    %v2417 = vpack.c.b16 %v2201, %v2197
    %v2418 = vpack.c.b16 %v2202, %v2198
    %v2419 = vpack.c.b16 %v2203, %v2199
    %v2420 = vpack.c.b16 %v2208, %v2204
    %v2421 = vpack.c.b16 %v2209, %v2205
    %v2422 = vpack.c.b16 %v2210, %v2206
    %v2423 = vpack.c.b16 %v2211, %v2207
    %v2424 = vpack.c.b16 %v2216, %v2212
    %v2425 = vpack.c.b16 %v2217, %v2213
    %v2426 = vpack.c.b16 %v2218, %v2214
    %v2427 = vpack.c.b16 %v2219, %v2215
    %v2428 = vpack.c.b16 %v2224, %v2220
    %v2429 = vpack.c.b16 %v2225, %v2221
    %v2430 = vpack.c.b16 %v2226, %v2222
    %v2431 = vpack.c.b16 %v2227, %v2223
    %v2432 = vpack.c.b16 %v2232, %v2228
    %v2433 = vpack.c.b16 %v2233, %v2229
    %v2434 = vpack.c.b16 %v2234, %v2230
    %v2435 = vpack.c.b16 %v2235, %v2231
    %v2436 = vpack.c.b16 %v2240, %v2236
    %v2437 = vpack.c.b16 %v2241, %v2237
    %v2438 = vpack.c.b16 %v2242, %v2238
    %v2439 = vpack.c.b16 %v2243, %v2239
    %v2440 = vpack.c.b16 %v2248, %v2244
    %v2441 = vpack.c.b16 %v2249, %v2245
    %v2442 = vpack.c.b16 %v2250, %v2246
    %v2443 = vpack.c.b16 %v2251, %v2247
    %v2444 = vpack.c.b16 %v2256, %v2252
    %v2445 = vpack.c.b16 %v2257, %v2253
    %v2446 = vpack.c.b16 %v2258, %v2254
    %v2447 = vpack.c.b16 %v2259, %v2255
    %v2448 = vpack.c.b16 %v2264, %v2260
    %v2449 = vpack.c.b16 %v2265, %v2261
    %v2450 = vpack.c.b16 %v2266, %v2262
    %v2451 = vpack.c.b16 %v2267, %v2263
    %v2452 = vpack.c.b16 %v2272, %v2268
    %v2453 = vpack.c.b16 %v2273, %v2269
    %v2454 = vpack.c.b16 %v2274, %v2270
    %v2455 = vpack.c.b16 %v2275, %v2271
    %v2456 = vpack.c.b16 %v2280, %v2276
    %v2457 = vpack.c.b16 %v2281, %v2277
    %v2458 = vpack.c.b16 %v2282, %v2278
    %v2459 = vpack.c.b16 %v2283, %v2279
    %v2460 = vpack.c.b16 %v2288, %v2284
    %v2461 = vpack.c.b16 %v2289, %v2285
    %v2462 = vpack.c.b16 %v2290, %v2286
    %v2463 = vpack.c.b16 %v2291, %v2287
    %v2464 = vpack.c.b16 %v2296, %v2292
    %v2465 = vpack.c.b16 %v2297, %v2293
    %v2466 = vpack.c.b16 %v2298, %v2294
    %v2467 = vpack.c.b16 %v2299, %v2295
    %v2468 = vpack.c.b16 %v2304, %v2300
    %v2469 = vpack.c.b16 %v2305, %v2301
    %v2470 = vpack.c.b16 %v2306, %v2302
    %v2471 = vpack.c.b16 %v2307, %v2303
    %v2472 = vpack.c.b16 %v2312, %v2308
    %v2473 = vpack.c.b16 %v2313, %v2309
    %v2474 = vpack.c.b16 %v2314, %v2310
    %v2475 = vpack.c.b16 %v2315, %v2311
    %v2476 = vpack.c.b16 %v2320, %v2316
    %v2477 = vpack.c.b16 %v2321, %v2317
    %v2478 = vpack.c.b16 %v2322, %v2318
    %v2479 = vpack.c.b16 %v2323, %v2319
    %v2480 = vpack.c.b16 %v2328, %v2324
    %v2481 = vpack.c.b16 %v2329, %v2325
    %v2482 = vpack.c.b16 %v2330, %v2326
    %v2483 = vpack.c.b16 %v2331, %v2327
    %v2484 = vpack.c.b16 %v2336, %v2332
    %v2485 = vpack.c.b16 %v2337, %v2333
    %v2486 = vpack.c.b16 %v2338, %v2334
    %v2487 = vpack.c.b16 %v2339, %v2335
    %v2488 = vpack.c.b16 %v2344, %v2340
    %v2489 = vpack.c.b16 %v2345, %v2341
    %v2490 = vpack.c.b16 %v2346, %v2342
    %v2491 = vpack.c.b16 %v2347, %v2343
    %v2492 = vpack.c.b16 %v2352, %v2348
    %v2493 = vpack.c.b16 %v2353, %v2349
    %v2494 = vpack.c.b16 %v2354, %v2350
    %v2495 = vpack.c.b16 %v2355, %v2351
    %v2496 = vpack.c.b16 %v2360, %v2356
    %v2497 = vpack.c.b16 %v2361, %v2357
    %v2498 = vpack.c.b16 %v2362, %v2358
    %v2499 = vpack.c.b16 %v2363, %v2359
    %v2500 = vpack.c.b16 %v2368, %v2364
    %v2501 = vpack.c.b16 %v2369, %v2365
    %v2502 = vpack.c.b16 %v2370, %v2366
    %v2503 = vpack.c.b16 %v2371, %v2367
    %v2504 = vpack.c.b16 %v2376, %v2372
    %v2505 = vpack.c.b16 %v2377, %v2373
    %v2506 = vpack.c.b16 %v2378, %v2374
    %v2507 = vpack.c.b16 %v2379, %v2375
    %2636 = vmatprep.subr.bf16.mxu0 %v2381
    %2637 = vmatpush1.bf16.msra.mxu0 %v2380
    %2638 = vmatprep.subr.bf16.mxu0 %v2385
    %2639 = vmatpush1.bf16.msra.mxu0 %v2384
    %2640 = vmatprep.subr.bf16.mxu0 %v2389
    %2641 = vmatpush1.bf16.msra.mxu0 %v2388
    %2642 = vmatprep.subr.bf16.mxu0 %v2393
    %2643 = vmatpush1.bf16.msra.mxu0 %v2392
    %2644 = vmatprep.subr.bf16.mxu0 %v2397
    %2645 = vmatpush1.bf16.msra.mxu0 %v2396
    %2646 = vmatprep.subr.bf16.mxu0 %v2401
    %2647 = vmatpush1.bf16.msra.mxu0 %v2400
    %2648 = vmatprep.subr.bf16.mxu0 %v2405
    %2649 = vmatpush1.bf16.msra.mxu0 %v2404
    %2650 = vmatprep.subr.bf16.mxu0 %v2409
    %2651 = vmatpush1.bf16.msra.mxu0 %v2408
    %2652 = vmatprep.subr.bf16.mxu0 %v2413
    %2653 = vmatpush1.bf16.msra.mxu0 %v2412
    %2654 = vmatprep.subr.bf16.mxu0 %v2417
    %2655 = vmatpush1.bf16.msra.mxu0 %v2416
    %2656 = vmatprep.subr.bf16.mxu0 %v2421
    %2657 = vmatpush1.bf16.msra.mxu0 %v2420
    %2658 = vmatprep.subr.bf16.mxu0 %v2425
    %2659 = vmatpush1.bf16.msra.mxu0 %v2424
    %2660 = vmatprep.subr.bf16.mxu0 %v2429
    %2661 = vmatpush1.bf16.msra.mxu0 %v2428
    %2662 = vmatprep.subr.bf16.mxu0 %v2433
    %2663 = vmatpush1.bf16.msra.mxu0 %v2432
    %2664 = vmatprep.subr.bf16.mxu0 %v2437
    %2665 = vmatpush1.bf16.msra.mxu0 %v2436
    %2666 = vmatprep.subr.bf16.mxu0 %v2441
    %2667 = vmatpush1.bf16.msra.mxu0 %v2440
    %2668 = vmatprep.mubr.bf16.mxu0 %v1843
    %2669 = vmatmul.mubr.bf16.gmra.mrb[0].mxu0 %v1842
    %v2670 = vpop.f32.mrb[0].mxu0
    %v2671 = vadd.f32 %v1979, %v2670
    %v2672 = vpop.f32.mrb[0].mxu0
    %v2673 = vadd.f32 %v1983, %v2672
    %v2674 = vpop.f32.mrb[0].mxu0
    %v2675 = vpop.f32.mrb[0].mxu0
    %2676 = vdwg.mxu0
    %2677 = vmatprep.subr.bf16.mxu0 %v2445
    %2678 = vmatpush1.bf16.msra.mxu0 %v2444
    %2679 = vmatprep.subr.bf16.mxu0 %v2449
    %2680 = vmatpush1.bf16.msra.mxu0 %v2448
    %2681 = vmatprep.subr.bf16.mxu0 %v2453
    %2682 = vmatpush1.bf16.msra.mxu0 %v2452
    %2683 = vmatprep.subr.bf16.mxu0 %v2457
    %2684 = vmatpush1.bf16.msra.mxu0 %v2456
    %2685 = vmatprep.subr.bf16.mxu0 %v2461
    %2686 = vmatpush1.bf16.msra.mxu0 %v2460
    %2687 = vmatprep.subr.bf16.mxu0 %v2465
    %2688 = vmatpush1.bf16.msra.mxu0 %v2464
    %2689 = vmatprep.subr.bf16.mxu0 %v2469
    %2690 = vmatpush1.bf16.msra.mxu0 %v2468
    %2691 = vmatprep.subr.bf16.mxu0 %v2473
    %2692 = vmatpush1.bf16.msra.mxu0 %v2472
    %2693 = vmatprep.subr.bf16.mxu0 %v2477
    %2694 = vmatpush1.bf16.msra.mxu0 %v2476
    %2695 = vmatprep.subr.bf16.mxu0 %v2481
    %2696 = vmatpush1.bf16.msra.mxu0 %v2480
    %2697 = vmatprep.subr.bf16.mxu0 %v2485
    %2698 = vmatpush1.bf16.msra.mxu0 %v2484
    %2699 = vmatprep.subr.bf16.mxu0 %v2489
    %2700 = vmatpush1.bf16.msra.mxu0 %v2488
    %2701 = vmatprep.subr.bf16.mxu0 %v2493
    %2702 = vmatpush1.bf16.msra.mxu0 %v2492
    %2703 = vmatprep.subr.bf16.mxu0 %v2497
    %2704 = vmatpush1.bf16.msra.mxu0 %v2496
    %2705 = vmatprep.subr.bf16.mxu0 %v2501
    %2706 = vmatpush1.bf16.msra.mxu0 %v2500
    %2707 = vmatprep.subr.bf16.mxu0 %v2505
    %2708 = vmatpush1.bf16.msra.mxu0 %v2504
    %2709 = vmatprep.mubr.bf16.mxu0 %v1845
    %2710 = vmatmul.mubr.bf16.gmra.mrb[0].mxu0 %v1844
    %v2711 = vpop.f32.mrb[0].mxu0
    %v2712 = vadd.f32 %v2671, %v2711
    %v2713 = vpop.f32.mrb[0].mxu0
    %v2714 = vadd.f32 %v2673, %v2713
    %v2715 = vpop.f32.mrb[0].mxu0
    %v2716 = vpop.f32.mrb[0].mxu0
    %2717 = vdwg.mxu0
    %2718 = vmatprep.subr.bf16.mxu0 %v2383
    %2719 = vmatpush1.bf16.msra.mxu0 %v2382
    %2720 = vmatprep.subr.bf16.mxu0 %v2387
    %2721 = vmatpush1.bf16.msra.mxu0 %v2386
    %2722 = vmatprep.subr.bf16.mxu0 %v2391
    %2723 = vmatpush1.bf16.msra.mxu0 %v2390
    %2724 = vmatprep.subr.bf16.mxu0 %v2395
    %2725 = vmatpush1.bf16.msra.mxu0 %v2394
    %2726 = vmatprep.subr.bf16.mxu0 %v2399
    %2727 = vmatpush1.bf16.msra.mxu0 %v2398
    %2728 = vmatprep.subr.bf16.mxu0 %v2403
    %2729 = vmatpush1.bf16.msra.mxu0 %v2402
    %2730 = vmatprep.subr.bf16.mxu0 %v2407
    %2731 = vmatpush1.bf16.msra.mxu0 %v2406
    %2732 = vmatprep.subr.bf16.mxu0 %v2411
    %2733 = vmatpush1.bf16.msra.mxu0 %v2410
    %2734 = vmatprep.subr.bf16.mxu0 %v2415
    %2735 = vmatpush1.bf16.msra.mxu0 %v2414
    %2736 = vmatprep.subr.bf16.mxu0 %v2419
    %2737 = vmatpush1.bf16.msra.mxu0 %v2418
    %2738 = vmatprep.subr.bf16.mxu0 %v2423
    %2739 = vmatpush1.bf16.msra.mxu0 %v2422
    %2740 = vmatprep.subr.bf16.mxu0 %v2427
    %2741 = vmatpush1.bf16.msra.mxu0 %v2426
    %2742 = vmatprep.subr.bf16.mxu0 %v2431
    %2743 = vmatpush1.bf16.msra.mxu0 %v2430
    %2744 = vmatprep.subr.bf16.mxu0 %v2435
    %2745 = vmatpush1.bf16.msra.mxu0 %v2434
    %2746 = vmatprep.subr.bf16.mxu0 %v2439
    %2747 = vmatpush1.bf16.msra.mxu0 %v2438
    %2748 = vmatprep.subr.bf16.mxu0 %v2443
    %2749 = vmatpush1.bf16.msra.mxu0 %v2442
    %2750 = vmatprep.mubr.bf16.mxu0 %v1843
    %2751 = vmatmul.mubr.bf16.gmra.mrb[0].mxu0 %v1842
    %v2752 = vpop.f32.mrb[0].mxu0
    %v2753 = vadd.f32 %v1987, %v2752
    %v2754 = vpop.f32.mrb[0].mxu0
    %v2755 = vadd.f32 %v1991, %v2754
    %v2756 = vpop.f32.mrb[0].mxu0
    %v2757 = vpop.f32.mrb[0].mxu0
    %2758 = vdwg.mxu0
    %2759 = vmatprep.subr.bf16.mxu0 %v2447
    %2760 = vmatpush1.bf16.msra.mxu0 %v2446
    %2761 = vmatprep.subr.bf16.mxu0 %v2451
    %2762 = vmatpush1.bf16.msra.mxu0 %v2450
    %2763 = vmatprep.subr.bf16.mxu0 %v2455
    %2764 = vmatpush1.bf16.msra.mxu0 %v2454
    %2765 = vmatprep.subr.bf16.mxu0 %v2459
    %2766 = vmatpush1.bf16.msra.mxu0 %v2458
    %2767 = vmatprep.subr.bf16.mxu0 %v2463
    %2768 = vmatpush1.bf16.msra.mxu0 %v2462
    %2769 = vmatprep.subr.bf16.mxu0 %v2467
    %2770 = vmatpush1.bf16.msra.mxu0 %v2466
    %2771 = vmatprep.subr.bf16.mxu0 %v2471
    %2772 = vmatpush1.bf16.msra.mxu0 %v2470
    %2773 = vmatprep.subr.bf16.mxu0 %v2475
    %2774 = vmatpush1.bf16.msra.mxu0 %v2474
    %2775 = vmatprep.subr.bf16.mxu0 %v2479
    %2776 = vmatpush1.bf16.msra.mxu0 %v2478
    %2777 = vmatprep.subr.bf16.mxu0 %v2483
    %2778 = vmatpush1.bf16.msra.mxu0 %v2482
    %2779 = vmatprep.subr.bf16.mxu0 %v2487
    %2780 = vmatpush1.bf16.msra.mxu0 %v2486
    %2781 = vmatprep.subr.bf16.mxu0 %v2491
    %2782 = vmatpush1.bf16.msra.mxu0 %v2490
    %2783 = vmatprep.subr.bf16.mxu0 %v2495
    %2784 = vmatpush1.bf16.msra.mxu0 %v2494
    %2785 = vmatprep.subr.bf16.mxu0 %v2499
    %2786 = vmatpush1.bf16.msra.mxu0 %v2498
    %2787 = vmatprep.subr.bf16.mxu0 %v2503
    %2788 = vmatpush1.bf16.msra.mxu0 %v2502
    %2789 = vmatprep.subr.bf16.mxu0 %v2507
    %2790 = vmatpush1.bf16.msra.mxu0 %v2506
    %2791 = vmatprep.mubr.bf16.mxu0 %v1845
    %2792 = vmatmul.mubr.bf16.gmra.mrb[0].mxu0 %v1844
    %v2793 = vpop.f32.mrb[0].mxu0
    %v2794 = vadd.f32 %v2753, %v2793
    %v2795 = vpop.f32.mrb[0].mxu0
    %v2796 = vadd.f32 %v2755, %v2795
    %v2797 = vpop.f32.mrb[0].mxu0
    %v2798 = vpop.f32.mrb[0].mxu0
    %2799 = vdwg.mxu0
    %v2800 = vmax.f32 %v2712, 0.0
    %v2801 = vmax.f32 %v2714, 0.0
    %v2802 = vmax.f32 %v2794, 0.0
    %v2803 = vmax.f32 %v2796, 0.0
    %v2804 = vpack.c.bf16 %v2800, %v2800
    %v2805 = vpack.c.bf16 %v2801, %v2801
    %v2806 = vpack.c.bf16 %v2802, %v2802
    %v2807 = vpack.c.bf16 %v2803, %v2803
    %v2808 = vld [vmem:[#allocation11] sm:$0xf]
    %v2809 = vld [vmem:[#allocation11 + $0x4] sm:$0xf]
    %v2810 = vld [vmem:[#allocation11 + $0x8] sm:$0xf]
    %v2811 = vld [vmem:[#allocation11 + $0xc] sm:$0xf]
    %v2812 = vld [vmem:[#allocation11 + $0x10] sm:$0xf]
    %v2813 = vld [vmem:[#allocation11 + $0x14] sm:$0xf]
    %v2814 = vld [vmem:[#allocation11 + $0x18] sm:$0xf]
    %v2815 = vld [vmem:[#allocation11 + $0x1c] sm:$0xf]
    %v2816 = vld [vmem:[#allocation11 + $0x20] sm:$0xf]
    %v2817 = vld [vmem:[#allocation11 + $0x24] sm:$0xf]
    %v2818 = vld [vmem:[#allocation11 + $0x28] sm:$0xf]
    %v2819 = vld [vmem:[#allocation11 + $0x2c] sm:$0xf]
    %v2820 = vld [vmem:[#allocation11 + $0x30] sm:$0xf]
    %v2821 = vld [vmem:[#allocation11 + $0x34] sm:$0xf]
    %v2822 = vld [vmem:[#allocation11 + $0x38] sm:$0xf]
    %v2823 = vld [vmem:[#allocation11 + $0x3c] sm:$0xf]
    %v2824 = vld [vmem:[#allocation11 + $0x40] sm:$0xf]
    %v2825 = vld [vmem:[#allocation11 + $0x44] sm:$0xf]
    %v2826 = vld [vmem:[#allocation11 + $0x48] sm:$0xf]
    %v2827 = vld [vmem:[#allocation11 + $0x4c] sm:$0xf]
    %v2828 = vld [vmem:[#allocation11 + $0x50] sm:$0xf]
    %v2829 = vld [vmem:[#allocation11 + $0x54] sm:$0xf]
    %v2830 = vld [vmem:[#allocation11 + $0x58] sm:$0xf]
    %v2831 = vld [vmem:[#allocation11 + $0x5c] sm:$0xf]
    %v2832 = vld [vmem:[#allocation11 + $0x60] sm:$0xf]
    %v2833 = vld [vmem:[#allocation11 + $0x64] sm:$0xf]
    %v2834 = vld [vmem:[#allocation11 + $0x68] sm:$0xf]
    %v2835 = vld [vmem:[#allocation11 + $0x6c] sm:$0xf]
    %v2836 = vld [vmem:[#allocation11 + $0x70] sm:$0xf]
    %v2837 = vld [vmem:[#allocation11 + $0x74] sm:$0xf]
    %v2838 = vld [vmem:[#allocation11 + $0x78] sm:$0xf]
    %v2839 = vld [vmem:[#allocation11 + $0x7c] sm:$0xf]
    %v2840 = vld [vmem:[#allocation11 + $0x80] sm:$0xf]
    %v2841 = vld [vmem:[#allocation11 + $0x84] sm:$0xf]
    %v2842 = vld [vmem:[#allocation11 + $0x88] sm:$0xf]
    %v2843 = vld [vmem:[#allocation11 + $0x8c] sm:$0xf]
    %v2844 = vld [vmem:[#allocation11 + $0x90] sm:$0xf]
    %v2845 = vld [vmem:[#allocation11 + $0x94] sm:$0xf]
    %v2846 = vld [vmem:[#allocation11 + $0x98] sm:$0xf]
    %v2847 = vld [vmem:[#allocation11 + $0x9c] sm:$0xf]
    %v2848 = vld [vmem:[#allocation11 + $0xa0] sm:$0xf]
    %v2849 = vld [vmem:[#allocation11 + $0xa4] sm:$0xf]
    %v2850 = vld [vmem:[#allocation11 + $0xa8] sm:$0xf]
    %v2851 = vld [vmem:[#allocation11 + $0xac] sm:$0xf]
    %v2852 = vld [vmem:[#allocation11 + $0xb0] sm:$0xf]
    %v2853 = vld [vmem:[#allocation11 + $0xb4] sm:$0xf]
    %v2854 = vld [vmem:[#allocation11 + $0xb8] sm:$0xf]
    %v2855 = vld [vmem:[#allocation11 + $0xbc] sm:$0xf]
    %v2856 = vld [vmem:[#allocation11 + $0xc0] sm:$0xf]
    %v2857 = vld [vmem:[#allocation11 + $0xc4] sm:$0xf]
    %v2858 = vld [vmem:[#allocation11 + $0xc8] sm:$0xf]
    %v2859 = vld [vmem:[#allocation11 + $0xcc] sm:$0xf]
    %v2860 = vld [vmem:[#allocation11 + $0xd0] sm:$0xf]
    %v2861 = vld [vmem:[#allocation11 + $0xd4] sm:$0xf]
    %v2862 = vld [vmem:[#allocation11 + $0xd8] sm:$0xf]
    %v2863 = vld [vmem:[#allocation11 + $0xdc] sm:$0xf]
    %v2864 = vld [vmem:[#allocation11 + $0xe0] sm:$0xf]
    %v2865 = vld [vmem:[#allocation11 + $0xe4] sm:$0xf]
    %v2866 = vld [vmem:[#allocation11 + $0xe8] sm:$0xf]
    %v2867 = vld [vmem:[#allocation11 + $0xec] sm:$0xf]
    %v2868 = vld [vmem:[#allocation11 + $0xf0] sm:$0xf]
    %v2869 = vld [vmem:[#allocation11 + $0xf4] sm:$0xf]
    %v2870 = vld [vmem:[#allocation11 + $0xf8] sm:$0xf]
    %v2871 = vld [vmem:[#allocation11 + $0xfc] sm:$0xf]
    %v2872 = vld [vmem:[#allocation13] sm:$0x1]
    %v2874 = vlaneseq
    %v2875 = vshrl.u32 %v2874, 7
    %v2876 = vsub.s32 0, %v2875
    %v2877 = vrot.slane %v2872, %v2876
    %v2943 = vunpack.c.l.b16 %v2808
    %v2944 = vunpack.c.l.b16 %v2809
    %v2945 = vunpack.c.l.b16 %v2810
    %v2946 = vunpack.c.l.b16 %v2811
    %v2947 = vunpack.c.l.b16 %v2812
    %v2948 = vunpack.c.l.b16 %v2813
    %v2949 = vunpack.c.l.b16 %v2814
    %v2950 = vunpack.c.l.b16 %v2815
    %v2951 = vunpack.c.l.b16 %v2816
    %v2952 = vunpack.c.l.b16 %v2817
    %v2953 = vunpack.c.l.b16 %v2818
    %v2954 = vunpack.c.l.b16 %v2819
    %v2955 = vunpack.c.l.b16 %v2820
    %v2956 = vunpack.c.l.b16 %v2821
    %v2957 = vunpack.c.l.b16 %v2822
    %v2958 = vunpack.c.l.b16 %v2823
    %v2959 = vunpack.c.l.b16 %v2824
    %v2960 = vunpack.c.l.b16 %v2825
    %v2961 = vunpack.c.l.b16 %v2826
    %v2962 = vunpack.c.l.b16 %v2827
    %v2963 = vunpack.c.l.b16 %v2828
    %v2964 = vunpack.c.l.b16 %v2829
    %v2965 = vunpack.c.l.b16 %v2830
    %v2966 = vunpack.c.l.b16 %v2831
    %v2967 = vunpack.c.l.b16 %v2832
    %v2968 = vunpack.c.l.b16 %v2833
    %v2969 = vunpack.c.l.b16 %v2834
    %v2970 = vunpack.c.l.b16 %v2835
    %v2971 = vunpack.c.l.b16 %v2836
    %v2972 = vunpack.c.l.b16 %v2837
    %v2973 = vunpack.c.l.b16 %v2838
    %v2974 = vunpack.c.l.b16 %v2839
    %v2975 = vunpack.c.l.b16 %v2840
    %v2976 = vunpack.c.l.b16 %v2841
    %v2977 = vunpack.c.l.b16 %v2842
    %v2978 = vunpack.c.l.b16 %v2843
    %v2979 = vunpack.c.l.b16 %v2844
    %v2980 = vunpack.c.l.b16 %v2845
    %v2981 = vunpack.c.l.b16 %v2846
    %v2982 = vunpack.c.l.b16 %v2847
    %v2983 = vunpack.c.l.b16 %v2848
    %v2984 = vunpack.c.l.b16 %v2849
    %v2985 = vunpack.c.l.b16 %v2850
    %v2986 = vunpack.c.l.b16 %v2851
    %v2987 = vunpack.c.l.b16 %v2852
    %v2988 = vunpack.c.l.b16 %v2853
    %v2989 = vunpack.c.l.b16 %v2854
    %v2990 = vunpack.c.l.b16 %v2855
    %v2991 = vunpack.c.l.b16 %v2856
    %v2992 = vunpack.c.l.b16 %v2857
    %v2993 = vunpack.c.l.b16 %v2858
    %v2994 = vunpack.c.l.b16 %v2859
    %v2995 = vunpack.c.l.b16 %v2860
    %v2996 = vunpack.c.l.b16 %v2861
    %v2997 = vunpack.c.l.b16 %v2862
    %v2998 = vunpack.c.l.b16 %v2863
    %v2999 = vunpack.c.l.b16 %v2864
    %v3000 = vunpack.c.l.b16 %v2865
    %v3001 = vunpack.c.l.b16 %v2866
    %v3002 = vunpack.c.l.b16 %v2867
    %v3003 = vunpack.c.l.b16 %v2868
    %v3004 = vunpack.c.l.b16 %v2869
    %v3005 = vunpack.c.l.b16 %v2870
    %v3006 = vunpack.c.l.b16 %v2871
    %v3007 = vpack.c.b16 %v2944, %v2943
    %v3008 = vpack.c.b16 %v2946, %v2945
    %v3009 = vpack.c.b16 %v2948, %v2947
    %v3010 = vpack.c.b16 %v2950, %v2949
    %v3011 = vpack.c.b16 %v2952, %v2951
    %v3012 = vpack.c.b16 %v2954, %v2953
    %v3013 = vpack.c.b16 %v2956, %v2955
    %v3014 = vpack.c.b16 %v2958, %v2957
    %v3015 = vpack.c.b16 %v2960, %v2959
    %v3016 = vpack.c.b16 %v2962, %v2961
    %v3017 = vpack.c.b16 %v2964, %v2963
    %v3018 = vpack.c.b16 %v2966, %v2965
    %v3019 = vpack.c.b16 %v2968, %v2967
    %v3020 = vpack.c.b16 %v2970, %v2969
    %v3021 = vpack.c.b16 %v2972, %v2971
    %v3022 = vpack.c.b16 %v2974, %v2973
    %v3023 = vpack.c.b16 %v2976, %v2975
    %v3024 = vpack.c.b16 %v2978, %v2977
    %v3025 = vpack.c.b16 %v2980, %v2979
    %v3026 = vpack.c.b16 %v2982, %v2981
    %v3027 = vpack.c.b16 %v2984, %v2983
    %v3028 = vpack.c.b16 %v2986, %v2985
    %v3029 = vpack.c.b16 %v2988, %v2987
    %v3030 = vpack.c.b16 %v2990, %v2989
    %v3031 = vpack.c.b16 %v2992, %v2991
    %v3032 = vpack.c.b16 %v2994, %v2993
    %v3033 = vpack.c.b16 %v2996, %v2995
    %v3034 = vpack.c.b16 %v2998, %v2997
    %v3035 = vpack.c.b16 %v3000, %v2999
    %v3036 = vpack.c.b16 %v3002, %v3001
    %v3037 = vpack.c.b16 %v3004, %v3003
    %v3038 = vpack.c.b16 %v3006, %v3005
    %3071 = vmatprep.subr.bf16.mxu0 0
    %3072 = vmatpush1.bf16.msra.mxu0 %v3007
    %3073 = vmatprep.subr.bf16.mxu0 0
    %3074 = vmatpush1.bf16.msra.mxu0 %v3008
    %3075 = vmatprep.subr.bf16.mxu0 0
    %3076 = vmatpush1.bf16.msra.mxu0 %v3009
    %3077 = vmatprep.subr.bf16.mxu0 0
    %3078 = vmatpush1.bf16.msra.mxu0 %v3010
    %3079 = vmatprep.subr.bf16.mxu0 0
    %3080 = vmatpush1.bf16.msra.mxu0 %v3011
    %3081 = vmatprep.subr.bf16.mxu0 0
    %3082 = vmatpush1.bf16.msra.mxu0 %v3012
    %3083 = vmatprep.subr.bf16.mxu0 0
    %3084 = vmatpush1.bf16.msra.mxu0 %v3013
    %3085 = vmatprep.subr.bf16.mxu0 0
    %3086 = vmatpush1.bf16.msra.mxu0 %v3014
    %3087 = vmatprep.subr.bf16.mxu0 0
    %3088 = vmatpush1.bf16.msra.mxu0 %v3015
    %3089 = vmatprep.subr.bf16.mxu0 0
    %3090 = vmatpush1.bf16.msra.mxu0 %v3016
    %3091 = vmatprep.subr.bf16.mxu0 0
    %3092 = vmatpush1.bf16.msra.mxu0 %v3017
    %3093 = vmatprep.subr.bf16.mxu0 0
    %3094 = vmatpush1.bf16.msra.mxu0 %v3018
    %3095 = vmatprep.subr.bf16.mxu0 0
    %3096 = vmatpush1.bf16.msra.mxu0 %v3019
    %3097 = vmatprep.subr.bf16.mxu0 0
    %3098 = vmatpush1.bf16.msra.mxu0 %v3020
    %3099 = vmatprep.subr.bf16.mxu0 0
    %3100 = vmatpush1.bf16.msra.mxu0 %v3021
    %3101 = vmatprep.subr.bf16.mxu0 0
    %3102 = vmatpush1.bf16.msra.mxu0 %v3022
    %3103 = vmatprep.mubr.bf16.mxu0 %v2805
    %3104 = vmatmul.mubr.bf16.gmra.mrb[0].mxu0 %v2804
    %v3105 = vpop.f32.mrb[0].mxu0
    %v3106 = vadd.f32 %v2877, %v3105
    %v3107 = vpop.f32.mrb[0].mxu0
    %v3108 = vpop.f32.mrb[0].mxu0
    %v3109 = vpop.f32.mrb[0].mxu0
    %3110 = vdwg.mxu0
    %3111 = vmatprep.subr.bf16.mxu0 0
    %3112 = vmatpush1.bf16.msra.mxu0 %v3023
    %3113 = vmatprep.subr.bf16.mxu0 0
    %3114 = vmatpush1.bf16.msra.mxu0 %v3024
    %3115 = vmatprep.subr.bf16.mxu0 0
    %3116 = vmatpush1.bf16.msra.mxu0 %v3025
    %3117 = vmatprep.subr.bf16.mxu0 0
    %3118 = vmatpush1.bf16.msra.mxu0 %v3026
    %3119 = vmatprep.subr.bf16.mxu0 0
    %3120 = vmatpush1.bf16.msra.mxu0 %v3027
    %3121 = vmatprep.subr.bf16.mxu0 0
    %3122 = vmatpush1.bf16.msra.mxu0 %v3028
    %3123 = vmatprep.subr.bf16.mxu0 0
    %3124 = vmatpush1.bf16.msra.mxu0 %v3029
    %3125 = vmatprep.subr.bf16.mxu0 0
    %3126 = vmatpush1.bf16.msra.mxu0 %v3030
    %3127 = vmatprep.subr.bf16.mxu0 0
    %3128 = vmatpush1.bf16.msra.mxu0 %v3031
    %3129 = vmatprep.subr.bf16.mxu0 0
    %3130 = vmatpush1.bf16.msra.mxu0 %v3032
    %3131 = vmatprep.subr.bf16.mxu0 0
    %3132 = vmatpush1.bf16.msra.mxu0 %v3033
    %3133 = vmatprep.subr.bf16.mxu0 0
    %3134 = vmatpush1.bf16.msra.mxu0 %v3034
    %3135 = vmatprep.subr.bf16.mxu0 0
    %3136 = vmatpush1.bf16.msra.mxu0 %v3035
    %3137 = vmatprep.subr.bf16.mxu0 0
    %3138 = vmatpush1.bf16.msra.mxu0 %v3036
    %3139 = vmatprep.subr.bf16.mxu0 0
    %3140 = vmatpush1.bf16.msra.mxu0 %v3037
    %3141 = vmatprep.subr.bf16.mxu0 0
    %3142 = vmatpush1.bf16.msra.mxu0 %v3038
    %3143 = vmatprep.mubr.bf16.mxu0 %v2807
    %3144 = vmatmul.mubr.bf16.gmra.mrb[0].mxu0 %v2806
    %v3145 = vpop.f32.mrb[0].mxu0
    %v3146 = vadd.f32 %v3106, %v3145
    %v3147 = vpop.f32.mrb[0].mxu0
    %v3148 = vpop.f32.mrb[0].mxu0
    %v3149 = vpop.f32.mrb[0].mxu0
    %3150 = vdwg.mxu0
    %3151 = vst [vmem:[#allocation14] sm:$0xff] %v3146
    // Predicated region
    $region58: #{neural_network_forward.1} parent=1 // pred_check
      _
    $region59: #{neural_network_forward.1} parent=1 // pred_check_branch
      %3153 = sbr.rel (0) target = $region61
    $region60: #{neural_network_forward.1} parent=1 // pred_region
      %s3155 = ssub.s32 128, 128
      %3156 = vsyncadd [#allocation4], %s3155
      %s3158 = sshll.u32 [#allocation14], 4
      %s3159 = int_to_ptr.vmem [resolvable:$true] %s3158
      %3161 = dma.vmem_to_hbm [thread:$0]  %s3159, 128, %s7, [#allocation4]
    $region61: #{neural_network_forward.1} parent=1 // pred_fallthru
      _
    // Predicated region
    $region62: #{neural_network_forward.1} parent=1 // pred_check
      _
    $region63: #{neural_network_forward.1} parent=1 // pred_check_branch
      %3163 = sbr.rel (0) target = $region65
    $region64: #{neural_network_forward.1} parent=1 // pred_region
      %3164 = dma.done [#allocation4], 128
    $region65: #{neural_network_forward.1} parent=1 // pred_fallthru
      _
    %3165 = vsyncpa [#allocation3], 1
    %3166 = vsyncpa [#allocation6], 1
    %3167 = vsyncpa [#allocation9], 1
    %3168 = vsyncpa [#allocation12], 1
    %3169 = vsyncpa [#allocation4], 1

</llo_original>
